<compile_context>
chip_gen: v6e
topology: v6e:2x2x1
jax: 0.10.0
libtpu: 0.0.40
codegen_flags: <defaults>
</compile_context>

<pallas_src>
import jax
import jax.numpy as jnp
from jax import lax
from jax.experimental import pallas as pl
from jax.experimental.pallas import tpu as pltpu

# ---------------------------------------------------------------------------
# Model hyper-parameters (small, deterministic, synthetic)
# ---------------------------------------------------------------------------
B = 4                 # full batch fed to the module
B2 = 2                # HybridClassifier slices inputs[:2]
CIN = 4
H = W = 16
HW = H * W            # 256 pixels per sample
COUT = 8              # conv output channels
KH = KW = 3
MODEL_OUT_DIM = 32    # model._output_dim
NUM_CLASSES = 10      # embedder._indexer._num_classes (only used by the discarded embedder)
OUT_PAD = 128         # lane-dense padded head width (sliced back to MODEL_OUT_DIM)
FLAT_PAD = (H + 2) * W + 2   # 290: H zero-padded by 1 row each side, flattened, +1 elem each end


# ---------------------------------------------------------------------------
# Pallas kernel: one sample per grid step
# ---------------------------------------------------------------------------
def _hybrid_model_kernel(x_ref, w9_ref, convb_ref, fcw_ref, fcb_ref, out_ref):
    """Conv3x3(pad=1) + bias + ReLU + global-avg-pool + Linear for one sample.

    x_ref    : (CIN, FLAT_PAD)    zero-padded, row-major flattened sample
    w9_ref   : (KH*KW, COUT, CIN) conv weights, one (COUT, CIN) slab per tap
    convb_ref: (COUT, 1)
    fcw_ref  : (COUT, OUT_PAD)    head weights, zero-padded to 128 lanes
    fcb_ref  : (1, OUT_PAD)
    out_ref  : (1, OUT_PAD)
    """
    f32 = jnp.float32
    # Lane masks reproducing the zero padding of the width dim: the flat shifted
    # windows wrap across rows, so the kw=0 tap is invalid at x==0 and the kw=2
    # tap is invalid at x==W-1.
    xcol = lax.broadcasted_iota(jnp.int32, (1, HW), 1) % W
    mask_l = (xcol > 0).astype(f32)
    mask_r = (xcol < W - 1).astype(f32)

    # 3x3 conv as 9 statically shifted matmul-accumulates (pixels on lanes).
    h = jnp.zeros((COUT, HW), f32)
    for kw in range(KW):
        acc = jnp.zeros((COUT, HW), f32)
        for kh in range(KH):
            k = kh * KW + kw               # tap index into w9
            s = kh * W + kw                # static lane offset of the shifted window
            xs = x_ref[:, s:s + HW]        # (CIN, HW)
            acc = acc + jnp.dot(w9_ref[k], xs, preferred_element_type=f32)
        if kw == 0:
            acc = acc * mask_l
        elif kw == KW - 1:
            acc = acc * mask_r
        h = h + acc

    # Bias + ReLU: full-width VPU ops.
    h = jnp.maximum(h + convb_ref[...], 0.0)

    # Global average pool as an MXU matmul: (1, HW) . (COUT, HW)^T -> (1, COUT).
    pool_row = jnp.full((1, HW), 1.0 / HW, dtype=f32)
    pooled = lax.dot_general(pool_row, h, (((1,), (1,)), ((), ())),
                             preferred_element_type=f32)

    # Head Linear, lane-dense (padded to OUT_PAD) output row.
    out_ref[...] = jnp.dot(pooled, fcw_ref[...], preferred_element_type=f32) + fcb_ref[...]


def hybrid_model_pallas(x2, conv_w, conv_b, fc_w, fc_b):
    """model(inputs[:2]): (B2, CIN, H, W) -> (B2, MODEL_OUT_DIM)."""
    b2 = x2.shape[0]
    # Zero-pad H by one row top/bottom, flatten spatial, pad flat axis by one element
    # each end; the 9 conv taps then become contiguous lane windows inside the kernel.
    xp = jnp.pad(x2, ((0, 0), (0, 0), (1, 1), (0, 0)))                         # (B2, CIN, H+2, W)
    xg = jnp.pad(xp.reshape(b2, CIN, (H + 2) * W), ((0, 0), (0, 0), (1, 1)))   # (B2, CIN, FLAT_PAD)

    w9 = jnp.transpose(conv_w, (2, 3, 0, 1)).reshape(KH * KW, COUT, CIN)       # (9, COUT, CIN)
    convb = conv_b.reshape(COUT, 1)
    fcw_pad = jnp.pad(fc_w, ((0, 0), (0, OUT_PAD - MODEL_OUT_DIM)))            # (COUT, OUT_PAD)
    fcb_pad = jnp.pad(fc_b[None, :], ((0, 0), (0, OUT_PAD - MODEL_OUT_DIM)))   # (1, OUT_PAD)

    out = pl.pallas_call(
        _hybrid_model_kernel,
        out_shape=jax.ShapeDtypeStruct((b2, 1, OUT_PAD), jnp.float32),
        grid=(b2,),
        in_specs=[
            pl.BlockSpec((None, CIN, FLAT_PAD), lambda b: (b, 0, 0)),
            pl.BlockSpec((KH * KW, COUT, CIN), lambda b: (0, 0, 0)),
            pl.BlockSpec((COUT, 1), lambda b: (0, 0)),
            pl.BlockSpec((COUT, OUT_PAD), lambda b: (0, 0)),
            pl.BlockSpec((1, OUT_PAD), lambda b: (0, 0)),
        ],
        out_specs=pl.BlockSpec((None, 1, OUT_PAD), lambda b: (b, 0, 0)),
        compiler_params=pltpu.CompilerParams(dimension_semantics=("parallel",)),
    )(xg, w9, convb, fcw_pad, fcb_pad)
    return out.reshape(b2, OUT_PAD)[:, :MODEL_OUT_DIM]


# ---------------------------------------------------------------------------
# Full HybridClassifier forward (jit-ted so the discarded embedder is DCE'd)
# ---------------------------------------------------------------------------
@jax.jit
def hybrid_classifier_forward(inputs, params):
    # embedder(inputs) -> (x, y): result is discarded by HybridClassifier.forward.
    # Kept for semantic fidelity; under jit XLA dead-code-eliminates it.
    flat = inputs.reshape(inputs.shape[0], -1)
    emb = flat @ params["emb_w"] + params["emb_b"]
    _x, _y = emb, emb  # the embedder returns a pair; both unused downstream

    # x = model(inputs[:2]) : the Pallas hot path.
    x2 = inputs[:B2]
    return hybrid_model_pallas(x2, params["conv_w"], params["conv_b"],
                               params["fc_w"], params["fc_b"])
    # TODO(synk): parent-class _fc (Linear(MODEL_OUT_DIM, NUM_CLASSES)) exists in
    # __init__ but is never applied in HybridClassifier.forward, so it is omitted.


def init_params(key):
    ks = jax.random.split(key, 6)
    flat_dim = CIN * H * W
    return {
        # embedder (output discarded, kept for semantic fidelity)
        "emb_w": 0.02 * jax.random.normal(ks[0], (flat_dim, NUM_CLASSES), jnp.float32),
        "emb_b": jnp.zeros((NUM_CLASSES,), jnp.float32),
        # model: Conv2d(CIN, COUT, 3, padding=1)
        "conv_w": 0.1 * jax.random.normal(ks[1], (COUT, CIN, KH, KW), jnp.float32),
        "conv_b": 0.01 * jax.random.normal(ks[2], (COUT,), jnp.float32),
        # model head: Linear(COUT, MODEL_OUT_DIM)
        "fc_w": 0.1 * jax.random.normal(ks[3], (COUT, MODEL_OUT_DIM), jnp.float32),
        "fc_b": 0.01 * jax.random.normal(ks[4], (MODEL_OUT_DIM,), jnp.float32),
    }


def _model_reference(x2, conv_w, conv_b, fc_w, fc_b):
    """Pure-JAX reference of the model path (for correctness check)."""
    y = lax.conv_general_dilated(x2, conv_w, window_strides=(1, 1), padding="SAME",
                                 dimension_numbers=("NCHW", "OIHW", "NCHW"),
                                 precision=lax.Precision.HIGHEST)
    y = jnp.maximum(y + conv_b.reshape(1, COUT, 1, 1), 0.0)
    pooled = y.mean(axis=(2, 3))
    return jnp.dot(pooled, fc_w, precision=lax.Precision.HIGHEST) + fc_b


if __name__ == "__main__":
    key = jax.random.PRNGKey(0)
    k_in, k_p = jax.random.split(key)
    inputs = jax.random.normal(k_in, (B, CIN, H, W), jnp.float32)
    params = init_params(k_p)

    out = hybrid_classifier_forward(inputs, params)
    out = jax.block_until_ready(out)
    assert out.shape == (B2, MODEL_OUT_DIM), out.shape
    assert out.dtype == jnp.float32

    ref = _model_reference(inputs[:B2], params["conv_w"], params["conv_b"],
                           params["fc_w"], params["fc_b"])
    max_err = float(jnp.max(jnp.abs(out - ref)))
    assert jnp.allclose(out, ref, atol=5e-3, rtol=5e-3), f"max abs err {max_err}"
    print("KERNEL_OK")
</pallas_src>

<mosaic_0001>
module attributes {stable_mosaic.version = 11 : i64} {
  func.func @_hybrid_model_kernel(%arg0: i32, %arg1: memref<1x4x290xf32, #tpu.memory_space<vmem>>, %arg2: memref<9x8x4xf32, #tpu.memory_space<vmem>>, %arg3: memref<8x1xf32, #tpu.memory_space<vmem>>, %arg4: memref<8x128xf32, #tpu.memory_space<vmem>>, %arg5: memref<1x128xf32, #tpu.memory_space<vmem>>, %arg6: memref<1x1x128xf32, #tpu.memory_space<vmem>>) attributes {dimension_semantics = [#tpu.dimension_semantics<parallel>], iteration_bounds = array<i64: 2>, scalar_prefetch = 0 : i64, scratch_operands = 0 : i64, tpu.core_type = #tpu.core_type<tc>, window_params = [{transform_indices = @transform_0, window_bounds = array<i64: 1, 4, 290>}, {pipeline_mode = #tpu.pipeline_mode<synchronous>, transform_indices = @transform_1, window_bounds = array<i64: 9, 8, 4>}, {pipeline_mode = #tpu.pipeline_mode<synchronous>, transform_indices = @transform_2, window_bounds = array<i64: 8, 1>}, {pipeline_mode = #tpu.pipeline_mode<synchronous>, transform_indices = @transform_3, window_bounds = array<i64: 8, 128>}, {pipeline_mode = #tpu.pipeline_mode<synchronous>, transform_indices = @transform_4, window_bounds = array<i64: 1, 128>}, {transform_indices = @transform_5, window_bounds = array<i64: 1, 1, 128>}]} {
    %0 = tpu.iota {dimensions = array<i32: 1>} : vector<1x256xi32>
    %c16_i32 = arith.constant 16 : i32
    %c0_i32 = arith.constant 0 : i32
    %1 = arith.cmpi eq, %c16_i32, %c0_i32 : i32
    %c1_i32 = arith.constant 1 : i32
    %2 = arith.select %1, %c1_i32, %c16_i32 : i32
    %3 = vector.broadcast %2 : i32 to vector<1x256xi32>
    %4 = arith.remsi %0, %3 : vector<1x256xi32>
    %c0_i32_0 = arith.constant 0 : i32
    %5 = vector.broadcast %c0_i32_0 : i32 to vector<1x256xi32>
    %6 = arith.cmpi ne, %4, %5 : vector<1x256xi32>
    %c0_i32_1 = arith.constant 0 : i32
    %7 = vector.broadcast %c0_i32_1 : i32 to vector<1x256xi32>
    %8 = arith.cmpi slt, %4, %7 : vector<1x256xi32>
    %c0_i32_2 = arith.constant 0 : i32
    %9 = arith.cmpi slt, %2, %c0_i32_2 : i32
    %10 = vector.broadcast %9 : i1 to vector<1x256xi1>
    %11 = vector.broadcast %10 : vector<1x256xi1> to vector<1x256xi1>
    %12 = arith.xori %8, %11 : vector<1x256xi1>
    %13 = arith.andi %12, %6 : vector<1x256xi1>
    %14 = vector.broadcast %2 : i32 to vector<1x256xi32>
    %15 = arith.addi %4, %14 : vector<1x256xi32>
    %16 = arith.select %13, %15, %4 : vector<1x256xi1>, vector<1x256xi32>
    %c0_i32_3 = arith.constant 0 : i32
    %17 = vector.broadcast %c0_i32_3 : i32 to vector<1x256xi32>
    %18 = arith.cmpi sgt, %16, %17 : vector<1x256xi32>
    %19 = arith.extui %18 : vector<1x256xi1> to vector<1x256xi32>
    %20 = arith.sitofp %19 : vector<1x256xi32> to vector<1x256xf32>
    %c15_i32 = arith.constant 15 : i32
    %21 = vector.broadcast %c15_i32 : i32 to vector<1x256xi32>
    %22 = arith.cmpi slt, %16, %21 : vector<1x256xi32>
    %23 = arith.extui %22 : vector<1x256xi1> to vector<1x256xi32>
    %24 = arith.sitofp %23 : vector<1x256xi32> to vector<1x256xf32>
    %cst = arith.constant 0.000000e+00 : f32
    %25 = vector.broadcast %cst : f32 to vector<8x256xf32>
    %cst_4 = arith.constant 0.000000e+00 : f32
    %26 = vector.broadcast %cst_4 : f32 to vector<8x256xf32>
    %c0 = arith.constant 0 : index
    %c0_5 = arith.constant 0 : index
    %c0_6 = arith.constant 0 : index
    %27 = vector.load %arg1[%c0, %c0_5, %c0_6] : memref<1x4x290xf32, #tpu.memory_space<vmem>>, vector<1x4x256xf32>
    %28 = vector.shape_cast %27 : vector<1x4x256xf32> to vector<4x256xf32>
    %c0_7 = arith.constant 0 : index
    %c0_8 = arith.constant 0 : index
    %c0_9 = arith.constant 0 : index
    %29 = vector.load %arg2[%c0_7, %c0_8, %c0_9] : memref<9x8x4xf32, #tpu.memory_space<vmem>>, vector<1x8x4xf32>
    %30 = vector.shape_cast %29 : vector<1x8x4xf32> to vector<8x4xf32>
    %cst_10 = arith.constant dense<0.000000e+00> : vector<8x256xf32>
    %31 = tpu.matmul %30, %28, %cst_10 {dimension_numbers = #tpu.dot_dimension_numbers<[1], [0], [0], [1], [0, 0, 1, 1], [], []>} : vector<8x4xf32>, vector<4x256xf32>, vector<8x256xf32> -> vector<8x256xf32>
    %32 = arith.addf %26, %31 : vector<8x256xf32>
    %c0_11 = arith.constant 0 : index
    %c0_12 = arith.constant 0 : index
    %c16 = arith.constant 16 : index
    %33 = vector.load %arg1[%c0_11, %c0_12, %c16] : memref<1x4x290xf32, #tpu.memory_space<vmem>>, vector<1x4x256xf32>
    %34 = vector.shape_cast %33 : vector<1x4x256xf32> to vector<4x256xf32>
    %c3 = arith.constant 3 : index
    %c0_13 = arith.constant 0 : index
    %c0_14 = arith.constant 0 : index
    %35 = vector.load %arg2[%c3, %c0_13, %c0_14] : memref<9x8x4xf32, #tpu.memory_space<vmem>>, vector<1x8x4xf32>
    %36 = vector.shape_cast %35 : vector<1x8x4xf32> to vector<8x4xf32>
    %cst_15 = arith.constant dense<0.000000e+00> : vector<8x256xf32>
    %37 = tpu.matmul %36, %34, %cst_15 {dimension_numbers = #tpu.dot_dimension_numbers<[1], [0], [0], [1], [0, 0, 1, 1], [], []>} : vector<8x4xf32>, vector<4x256xf32>, vector<8x256xf32> -> vector<8x256xf32>
    %38 = arith.addf %32, %37 : vector<8x256xf32>
    %c0_16 = arith.constant 0 : index
    %c0_17 = arith.constant 0 : index
    %c32 = arith.constant 32 : index
    %39 = vector.load %arg1[%c0_16, %c0_17, %c32] : memref<1x4x290xf32, #tpu.memory_space<vmem>>, vector<1x4x256xf32>
    %40 = vector.shape_cast %39 : vector<1x4x256xf32> to vector<4x256xf32>
    %c6 = arith.constant 6 : index
    %c0_18 = arith.constant 0 : index
    %c0_19 = arith.constant 0 : index
    %41 = vector.load %arg2[%c6, %c0_18, %c0_19] : memref<9x8x4xf32, #tpu.memory_space<vmem>>, vector<1x8x4xf32>
    %42 = vector.shape_cast %41 : vector<1x8x4xf32> to vector<8x4xf32>
    %cst_20 = arith.constant dense<0.000000e+00> : vector<8x256xf32>
    %43 = tpu.matmul %42, %40, %cst_20 {dimension_numbers = #tpu.dot_dimension_numbers<[1], [0], [0], [1], [0, 0, 1, 1], [], []>} : vector<8x4xf32>, vector<4x256xf32>, vector<8x256xf32> -> vector<8x256xf32>
    %44 = arith.addf %38, %43 : vector<8x256xf32>
    %45 = vector.broadcast %20 : vector<1x256xf32> to vector<8x256xf32>
    %46 = arith.mulf %44, %45 : vector<8x256xf32>
    %47 = arith.addf %25, %46 : vector<8x256xf32>
    %cst_21 = arith.constant 0.000000e+00 : f32
    %48 = vector.broadcast %cst_21 : f32 to vector<8x256xf32>
    %c0_22 = arith.constant 0 : index
    %c0_23 = arith.constant 0 : index
    %c1 = arith.constant 1 : index
    %49 = vector.load %arg1[%c0_22, %c0_23, %c1] : memref<1x4x290xf32, #tpu.memory_space<vmem>>, vector<1x4x256xf32>
    %50 = vector.shape_cast %49 : vector<1x4x256xf32> to vector<4x256xf32>
    %c1_24 = arith.constant 1 : index
    %c0_25 = arith.constant 0 : index
    %c0_26 = arith.constant 0 : index
    %51 = vector.load %arg2[%c1_24, %c0_25, %c0_26] : memref<9x8x4xf32, #tpu.memory_space<vmem>>, vector<1x8x4xf32>
    %52 = vector.shape_cast %51 : vector<1x8x4xf32> to vector<8x4xf32>
    %cst_27 = arith.constant dense<0.000000e+00> : vector<8x256xf32>
    %53 = tpu.matmul %52, %50, %cst_27 {dimension_numbers = #tpu.dot_dimension_numbers<[1], [0], [0], [1], [0, 0, 1, 1], [], []>} : vector<8x4xf32>, vector<4x256xf32>, vector<8x256xf32> -> vector<8x256xf32>
    %54 = arith.addf %48, %53 : vector<8x256xf32>
    %c0_28 = arith.constant 0 : index
    %c0_29 = arith.constant 0 : index
    %c17 = arith.constant 17 : index
    %55 = vector.load %arg1[%c0_28, %c0_29, %c17] : memref<1x4x290xf32, #tpu.memory_space<vmem>>, vector<1x4x256xf32>
    %56 = vector.shape_cast %55 : vector<1x4x256xf32> to vector<4x256xf32>
    %c4 = arith.constant 4 : index
    %c0_30 = arith.constant 0 : index
    %c0_31 = arith.constant 0 : index
    %57 = vector.load %arg2[%c4, %c0_30, %c0_31] : memref<9x8x4xf32, #tpu.memory_space<vmem>>, vector<1x8x4xf32>
    %58 = vector.shape_cast %57 : vector<1x8x4xf32> to vector<8x4xf32>
    %cst_32 = arith.constant dense<0.000000e+00> : vector<8x256xf32>
    %59 = tpu.matmul %58, %56, %cst_32 {dimension_numbers = #tpu.dot_dimension_numbers<[1], [0], [0], [1], [0, 0, 1, 1], [], []>} : vector<8x4xf32>, vector<4x256xf32>, vector<8x256xf32> -> vector<8x256xf32>
    %60 = arith.addf %54, %59 : vector<8x256xf32>
    %c0_33 = arith.constant 0 : index
    %c0_34 = arith.constant 0 : index
    %c33 = arith.constant 33 : index
    %61 = vector.load %arg1[%c0_33, %c0_34, %c33] : memref<1x4x290xf32, #tpu.memory_space<vmem>>, vector<1x4x256xf32>
    %62 = vector.shape_cast %61 : vector<1x4x256xf32> to vector<4x256xf32>
    %c7 = arith.constant 7 : index
    %c0_35 = arith.constant 0 : index
    %c0_36 = arith.constant 0 : index
    %63 = vector.load %arg2[%c7, %c0_35, %c0_36] : memref<9x8x4xf32, #tpu.memory_space<vmem>>, vector<1x8x4xf32>
    %64 = vector.shape_cast %63 : vector<1x8x4xf32> to vector<8x4xf32>
    %cst_37 = arith.constant dense<0.000000e+00> : vector<8x256xf32>
    %65 = tpu.matmul %64, %62, %cst_37 {dimension_numbers = #tpu.dot_dimension_numbers<[1], [0], [0], [1], [0, 0, 1, 1], [], []>} : vector<8x4xf32>, vector<4x256xf32>, vector<8x256xf32> -> vector<8x256xf32>
    %66 = arith.addf %60, %65 : vector<8x256xf32>
    %67 = arith.addf %47, %66 : vector<8x256xf32>
    %cst_38 = arith.constant 0.000000e+00 : f32
    %68 = vector.broadcast %cst_38 : f32 to vector<8x256xf32>
    %c0_39 = arith.constant 0 : index
    %c0_40 = arith.constant 0 : index
    %c2 = arith.constant 2 : index
    %69 = vector.load %arg1[%c0_39, %c0_40, %c2] : memref<1x4x290xf32, #tpu.memory_space<vmem>>, vector<1x4x256xf32>
    %70 = vector.shape_cast %69 : vector<1x4x256xf32> to vector<4x256xf32>
    %c2_41 = arith.constant 2 : index
    %c0_42 = arith.constant 0 : index
    %c0_43 = arith.constant 0 : index
    %71 = vector.load %arg2[%c2_41, %c0_42, %c0_43] : memref<9x8x4xf32, #tpu.memory_space<vmem>>, vector<1x8x4xf32>
    %72 = vector.shape_cast %71 : vector<1x8x4xf32> to vector<8x4xf32>
    %cst_44 = arith.constant dense<0.000000e+00> : vector<8x256xf32>
    %73 = tpu.matmul %72, %70, %cst_44 {dimension_numbers = #tpu.dot_dimension_numbers<[1], [0], [0], [1], [0, 0, 1, 1], [], []>} : vector<8x4xf32>, vector<4x256xf32>, vector<8x256xf32> -> vector<8x256xf32>
    %74 = arith.addf %68, %73 : vector<8x256xf32>
    %c0_45 = arith.constant 0 : index
    %c0_46 = arith.constant 0 : index
    %c18 = arith.constant 18 : index
    %75 = vector.load %arg1[%c0_45, %c0_46, %c18] : memref<1x4x290xf32, #tpu.memory_space<vmem>>, vector<1x4x256xf32>
    %76 = vector.shape_cast %75 : vector<1x4x256xf32> to vector<4x256xf32>
    %c5 = arith.constant 5 : index
    %c0_47 = arith.constant 0 : index
    %c0_48 = arith.constant 0 : index
    %77 = vector.load %arg2[%c5, %c0_47, %c0_48] : memref<9x8x4xf32, #tpu.memory_space<vmem>>, vector<1x8x4xf32>
    %78 = vector.shape_cast %77 : vector<1x8x4xf32> to vector<8x4xf32>
    %cst_49 = arith.constant dense<0.000000e+00> : vector<8x256xf32>
    %79 = tpu.matmul %78, %76, %cst_49 {dimension_numbers = #tpu.dot_dimension_numbers<[1], [0], [0], [1], [0, 0, 1, 1], [], []>} : vector<8x4xf32>, vector<4x256xf32>, vector<8x256xf32> -> vector<8x256xf32>
    %80 = arith.addf %74, %79 : vector<8x256xf32>
    %c0_50 = arith.constant 0 : index
    %c0_51 = arith.constant 0 : index
    %c34 = arith.constant 34 : index
    %81 = vector.load %arg1[%c0_50, %c0_51, %c34] : memref<1x4x290xf32, #tpu.memory_space<vmem>>, vector<1x4x256xf32>
    %82 = vector.shape_cast %81 : vector<1x4x256xf32> to vector<4x256xf32>
    %c8 = arith.constant 8 : index
    %c0_52 = arith.constant 0 : index
    %c0_53 = arith.constant 0 : index
    %83 = vector.load %arg2[%c8, %c0_52, %c0_53] : memref<9x8x4xf32, #tpu.memory_space<vmem>>, vector<1x8x4xf32>
    %84 = vector.shape_cast %83 : vector<1x8x4xf32> to vector<8x4xf32>
    %cst_54 = arith.constant dense<0.000000e+00> : vector<8x256xf32>
    %85 = tpu.matmul %84, %82, %cst_54 {dimension_numbers = #tpu.dot_dimension_numbers<[1], [0], [0], [1], [0, 0, 1, 1], [], []>} : vector<8x4xf32>, vector<4x256xf32>, vector<8x256xf32> -> vector<8x256xf32>
    %86 = arith.addf %80, %85 : vector<8x256xf32>
    %87 = vector.broadcast %24 : vector<1x256xf32> to vector<8x256xf32>
    %88 = arith.mulf %86, %87 : vector<8x256xf32>
    %89 = arith.addf %67, %88 : vector<8x256xf32>
    %c0_55 = arith.constant 0 : index
    %c0_56 = arith.constant 0 : index
    %90 = vector.load %arg3[%c0_55, %c0_56] : memref<8x1xf32, #tpu.memory_space<vmem>>, vector<8x1xf32>
    %91 = vector.broadcast %90 : vector<8x1xf32> to vector<8x256xf32>
    %92 = arith.addf %89, %91 : vector<8x256xf32>
    %cst_57 = arith.constant 0.000000e+00 : f32
    %93 = vector.broadcast %cst_57 : f32 to vector<8x256xf32>
    %94 = arith.maximumf %92, %93 : vector<8x256xf32>
    %cst_58 = arith.constant 3.906250e-03 : f32
    %95 = vector.broadcast %cst_58 : f32 to vector<1x256xf32>
    %cst_59 = arith.constant dense<0.000000e+00> : vector<1x8xf32>
    %96 = tpu.matmul %95, %94, %cst_59 {dimension_numbers = #tpu.dot_dimension_numbers<[1], [1], [0], [0], [0, 0, 1, 0], [], []>} : vector<1x256xf32>, vector<8x256xf32>, vector<1x8xf32> -> vector<1x8xf32>
    %c0_60 = arith.constant 0 : index
    %c0_61 = arith.constant 0 : index
    %97 = vector.load %arg4[%c0_60, %c0_61] : memref<8x128xf32, #tpu.memory_space<vmem>>, vector<8x128xf32>
    %cst_62 = arith.constant dense<0.000000e+00> : vector<1x128xf32>
    %98 = tpu.matmul %96, %97, %cst_62 {dimension_numbers = #tpu.dot_dimension_numbers<[1], [0], [0], [1], [0, 0, 1, 1], [], []>} : vector<1x8xf32>, vector<8x128xf32>, vector<1x128xf32> -> vector<1x128xf32>
    %c0_63 = arith.constant 0 : index
    %c0_64 = arith.constant 0 : index
    %99 = vector.load %arg5[%c0_63, %c0_64] : memref<1x128xf32, #tpu.memory_space<vmem>>, vector<1x128xf32>
    %100 = arith.addf %98, %99 : vector<1x128xf32>
    %c0_65 = arith.constant 0 : index
    %c0_66 = arith.constant 0 : index
    %c0_67 = arith.constant 0 : index
    %101 = vector.load %arg6[%c0_65, %c0_66, %c0_67] : memref<1x1x128xf32, #tpu.memory_space<vmem>>, vector<1x1x128xf32>
    %102 = vector.shape_cast %101 : vector<1x1x128xf32> to vector<1x128xf32>
    %103 = vector.shape_cast %100 : vector<1x128xf32> to vector<1x1x128xf32>
    tpu.vector_store %arg6[%c0_65, %c0_66, %c0_67], %103 {strides = array<i32>} : memref<1x1x128xf32, #tpu.memory_space<vmem>>, vector<1x1x128xf32>,
    return
  }
  func.func @transform_0(%arg0: i32) -> (i32, i32, i32) {
    %c0_i32 = arith.constant 0 : i32
    %c0_i32_0 = arith.constant 0 : i32
    %c0_i32_1 = arith.constant 0 : i32
    return %arg0, %c0_i32, %c0_i32_0 : i32, i32, i32
  }
  func.func @transform_1(%arg0: i32) -> (i32, i32, i32) {
    %c0_i32 = arith.constant 0 : i32
    %c0_i32_0 = arith.constant 0 : i32
    %c0_i32_1 = arith.constant 0 : i32
    %c0_i32_2 = arith.constant 0 : i32
    return %c0_i32, %c0_i32_0, %c0_i32_1 : i32, i32, i32
  }
  func.func @transform_2(%arg0: i32) -> (i32, i32) {
    %c0_i32 = arith.constant 0 : i32
    %c0_i32_0 = arith.constant 0 : i32
    %c0_i32_1 = arith.constant 0 : i32
    return %c0_i32, %c0_i32_0 : i32, i32
  }
  func.func @transform_3(%arg0: i32) -> (i32, i32) {
    %c0_i32 = arith.constant 0 : i32
    %c0_i32_0 = arith.constant 0 : i32
    %c0_i32_1 = arith.constant 0 : i32
    return %c0_i32, %c0_i32_0 : i32, i32
  }
  func.func @transform_4(%arg0: i32) -> (i32, i32) {
    %c0_i32 = arith.constant 0 : i32
    %c0_i32_0 = arith.constant 0 : i32
    %c0_i32_1 = arith.constant 0 : i32
    return %c0_i32, %c0_i32_0 : i32, i32
  }
  func.func @transform_5(%arg0: i32) -> (i32, i32, i32) {
    %c0_i32 = arith.constant 0 : i32
    %c0_i32_0 = arith.constant 0 : i32
    %c0_i32_1 = arith.constant 0 : i32
    return %arg0, %c0_i32, %c0_i32_0 : i32, i32, i32
  }
}

</mosaic_0001>

<llo_original>
// kernel: hybrid_classifier_forward.1
$region0: #{hybrid_classifier_forward.1}
  #allocation0 [shape = 'u32[]', space=smem, size = 0x4, offset = 0x4, fixed_abs, tag = 'smem constant byte address 0x4 - core index']
  #allocation1 [shape = 'u32[144,128]{1,0:T(1,128)}', space=vmem, size = 0x12000, scoped, tag = 'internal scratch']
  %s0 = inlined_call_operand.vmem [shape: f32[2,4,290], index: 0, kind: input, shape index: {}]
  %s1 = inlined_call_operand.vmem [shape: f32[9,8,4], index: 1, kind: input, shape index: {}]
  %s2 = inlined_call_operand.vmem [shape: f32[8,1], index: 2, kind: input, shape index: {}]
  %s3 = inlined_call_operand.vmem [shape: f32[8,128], index: 3, kind: input, shape index: {}]
  %s4 = inlined_call_operand.vmem [shape: f32[1,128], index: 4, kind: input, shape index: {}]
  %s5 = inlined_call_operand.hbm [shape: f32[2,1,128], index: 5, kind: output, shape index: {}]
  %s6 = sld [smem:[#allocation0]]
  $region53: #{hybrid_classifier_forward.1} parent=0
    _
  %s8 = ssub.s32 1, %s6
  %s9 = scalar_select 0, %s8, %s6
  $region1: #{hybrid_classifier_forward.1} parent=0
    #allocation2 [shape = 'u8[1024]{0}', space=vmem, size = 0x400, scoped, tag = 'output window, operand 0']
    #allocation3 [shape = 's32[2]{0}', space=sflag, size = 0x8, scoped, tag = 'scoped memory for hybrid_classifier_forward.1']
    %10 = vsyncpa [#allocation3], 0
    %s11 = scalar_lea.sflag [#allocation3], 1
    %12 = vsyncpa %s11, 0
    loop: start=0, step=1, limit=4
    $region2: #{hybrid_classifier_forward.1} parent=1 // loop_pre_header
      _
    $region3: #{hybrid_classifier_forward.1} parent=1 // loop_header
      %s14 = sphi 0, %s18
      %p15 = scmp.ge.s32.totalorder %s14, 4
      %s24 = sphi 0, %s26
      %s27 = sphi 0, %s24
      %s28 = sphi 0, %s27
      %s44 = sphi 0, %s28
      %s48 = sphi 0, %s48
      %s50 = sphi 0, %s48
      %s51 = sphi 0, %s50
      %s65 = sphi 0, %s51
      %s69 = sphi 0, %s69
      %s71 = sphi 0, %s69
      %s72 = sphi 0, %s71
      %s86 = sphi 0, %s72
      %s90 = sphi 0, %s90
      %s92 = sphi 0, %s90
      %s93 = sphi 0, %s92
      %s107 = sphi 0, %s93
      %s111 = sphi 0, %s111
      %s113 = sphi 0, %s111
      %s114 = sphi 0, %s113
      %s128 = sphi 0, %s114
      %s134 = sphi 0, %s136
      %s137 = sphi 0, %s134
      %s138 = sphi 0, %s137
      %s154 = sphi 0, %s138
    $region4: #{hybrid_classifier_forward.1} parent=1 // loop_header_branch
      %17 = sbr.rel (%p15) target = $region8
    $region5: #{hybrid_classifier_forward.1} parent=1 // loop_body
      %s19 = ssub.s32 %s14, 1
      %s20 = ssub.s32 %s14, 2
      %s21 = sadd.s32 %s14, 1
      %s22 = ssub.s32 %s14, %s21
      %p23 = scmp.eq.s32.totalorder %s22, 0
      %s25 = sadd.s32 %s24, 1
      %s26 = scalar_select %p23, %s24, %s25
      %p29 = pneg %p23
      %p30 = scmp.eq.s32.totalorder %s14, 1
      %p31 = por %p29, %p30
      %p32 = scmp.ne.s32.totalorder %s24, %s27
      %p33 = scmp.eq.s32.totalorder %s14, 0
      %p34 = por %p32, %p33
      %p35 = scmp.ne.s32.totalorder %s24, %s27
      %p36 = scmp.eq.s32.totalorder %s19, 1
      %p37 = por %p35, %p36
      %p38 = scmp.ne.s32.totalorder %s27, %s28
      %p39 = scmp.eq.s32.totalorder %s19, 0
      %p40 = por %p38, %p39
      %p41 = scmp.ne.s32.totalorder %s27, %s28
      %p42 = scmp.eq.s32.totalorder %s20, 1
      %p43 = por %p41, %p42
      %p45 = scmp.ne.s32.totalorder %s28, %s44
      %p46 = scmp.eq.s32.totalorder %s20, 0
      %p47 = por %p45, %p46
      %s49 = sadd.s32 %s48, 1
      %p52 = scmp.eq.s32.totalorder %s14, 1
      %p53 = scmp.ne.s32.totalorder %s48, %s50
      %p54 = scmp.eq.s32.totalorder %s14, 0
      %p55 = por %p53, %p54
      %p56 = scmp.ne.s32.totalorder %s48, %s50
      %p57 = scmp.eq.s32.totalorder %s19, 1
      %p58 = por %p56, %p57
      %p59 = scmp.ne.s32.totalorder %s50, %s51
      %p60 = scmp.eq.s32.totalorder %s19, 0
      %p61 = por %p59, %p60
      %p62 = scmp.ne.s32.totalorder %s50, %s51
      %p63 = scmp.eq.s32.totalorder %s20, 1
      %p64 = por %p62, %p63
      %p66 = scmp.ne.s32.totalorder %s51, %s65
      %p67 = scmp.eq.s32.totalorder %s20, 0
      %p68 = por %p66, %p67
      %s70 = sadd.s32 %s69, 1
      %p73 = scmp.eq.s32.totalorder %s14, 1
      %p74 = scmp.ne.s32.totalorder %s69, %s71
      %p75 = scmp.eq.s32.totalorder %s14, 0
      %p76 = por %p74, %p75
      %p77 = scmp.ne.s32.totalorder %s69, %s71
      %p78 = scmp.eq.s32.totalorder %s19, 1
      %p79 = por %p77, %p78
      %p80 = scmp.ne.s32.totalorder %s71, %s72
      %p81 = scmp.eq.s32.totalorder %s19, 0
      %p82 = por %p80, %p81
      %p83 = scmp.ne.s32.totalorder %s71, %s72
      %p84 = scmp.eq.s32.totalorder %s20, 1
      %p85 = por %p83, %p84
      %p87 = scmp.ne.s32.totalorder %s72, %s86
      %p88 = scmp.eq.s32.totalorder %s20, 0
      %p89 = por %p87, %p88
      %s91 = sadd.s32 %s90, 1
      %p94 = scmp.eq.s32.totalorder %s14, 1
      %p95 = scmp.ne.s32.totalorder %s90, %s92
      %p96 = scmp.eq.s32.totalorder %s14, 0
      %p97 = por %p95, %p96
      %p98 = scmp.ne.s32.totalorder %s90, %s92
      %p99 = scmp.eq.s32.totalorder %s19, 1
      %p100 = por %p98, %p99
      %p101 = scmp.ne.s32.totalorder %s92, %s93
      %p102 = scmp.eq.s32.totalorder %s19, 0
      %p103 = por %p101, %p102
      %p104 = scmp.ne.s32.totalorder %s92, %s93
      %p105 = scmp.eq.s32.totalorder %s20, 1
      %p106 = por %p104, %p105
      %p108 = scmp.ne.s32.totalorder %s93, %s107
      %p109 = scmp.eq.s32.totalorder %s20, 0
      %p110 = por %p108, %p109
      %s112 = sadd.s32 %s111, 1
      %p115 = scmp.eq.s32.totalorder %s14, 1
      %p116 = scmp.ne.s32.totalorder %s111, %s113
      %p117 = scmp.eq.s32.totalorder %s14, 0
      %p118 = por %p116, %p117
      %p119 = scmp.ne.s32.totalorder %s111, %s113
      %p120 = scmp.eq.s32.totalorder %s19, 1
      %p121 = por %p119, %p120
      %p122 = scmp.ne.s32.totalorder %s113, %s114
      %p123 = scmp.eq.s32.totalorder %s19, 0
      %p124 = por %p122, %p123
      %p125 = scmp.ne.s32.totalorder %s113, %s114
      %p126 = scmp.eq.s32.totalorder %s20, 1
      %p127 = por %p125, %p126
      %p129 = scmp.ne.s32.totalorder %s114, %s128
      %p130 = scmp.eq.s32.totalorder %s20, 0
      %p131 = por %p129, %p130
      %s132 = ssub.s32 %s14, %s21
      %p133 = scmp.eq.s32.totalorder %s132, 0
      %s135 = sadd.s32 %s134, 1
      %s136 = scalar_select %p133, %s134, %s135
      %p139 = pneg %p133
      %p140 = scmp.eq.s32.totalorder %s14, 1
      %p141 = por %p139, %p140
      %p142 = scmp.ne.s32.totalorder %s134, %s137
      %p143 = scmp.eq.s32.totalorder %s14, 0
      %p144 = por %p142, %p143
      %p145 = scmp.ne.s32.totalorder %s134, %s137
      %p146 = scmp.eq.s32.totalorder %s19, 1
      %p147 = por %p145, %p146
      %p148 = scmp.ne.s32.totalorder %s137, %s138
      %p149 = scmp.eq.s32.totalorder %s19, 0
      %p150 = por %p148, %p149
      %p151 = scmp.ne.s32.totalorder %s137, %s138
      %p152 = scmp.eq.s32.totalorder %s20, 1
      %p153 = por %p151, %p152
      %p155 = scmp.ne.s32.totalorder %s138, %s154
      %p156 = scmp.eq.s32.totalorder %s20, 0
      %p157 = por %p155, %p156
      %p158 = scmp.le.s32.totalorder 1, %s14
      %p159 = scmp.lt.s32.totalorder %s14, 3
      %p160 = pnand %p158, %p159
      %p161 = pneg %p160
      // Predicated region
      $region9: #{hybrid_classifier_forward.1} parent=5 // pred_check
        _
      $region10: #{hybrid_classifier_forward.1} parent=5 // pred_check_branch
        %163 = sbr.rel (%p160) target = $region12
      $region11: #{hybrid_classifier_forward.1} parent=5 // pred_region
        %s164 = ssub.s32 %s14, 1
        // Predicated region
        $region13: #{hybrid_classifier_forward.1} parent=11 // pred_check
          %p165 = pneg %p61
        $region14: #{hybrid_classifier_forward.1} parent=11 // pred_check_branch
          %167 = sbr.rel (%p165) target = $region16
        $region15: #{hybrid_classifier_forward.1} parent=11 // pred_region
          _
        $region16: #{hybrid_classifier_forward.1} parent=11 // pred_fallthru
          _
        // Predicated region
        $region17: #{hybrid_classifier_forward.1} parent=11 // pred_check
          %p168 = pneg %p82
        $region18: #{hybrid_classifier_forward.1} parent=11 // pred_check_branch
          %170 = sbr.rel (%p168) target = $region20
        $region19: #{hybrid_classifier_forward.1} parent=11 // pred_region
          _
        $region20: #{hybrid_classifier_forward.1} parent=11 // pred_fallthru
          _
        // Predicated region
        $region21: #{hybrid_classifier_forward.1} parent=11 // pred_check
          %p171 = pneg %p103
        $region22: #{hybrid_classifier_forward.1} parent=11 // pred_check_branch
          %173 = sbr.rel (%p171) target = $region24
        $region23: #{hybrid_classifier_forward.1} parent=11 // pred_region
          _
        $region24: #{hybrid_classifier_forward.1} parent=11 // pred_fallthru
          _
        // Predicated region
        $region25: #{hybrid_classifier_forward.1} parent=11 // pred_check
          %p174 = pneg %p124
        $region26: #{hybrid_classifier_forward.1} parent=11 // pred_check_branch
          %176 = sbr.rel (%p174) target = $region28
        $region27: #{hybrid_classifier_forward.1} parent=11 // pred_region
          _
        $region28: #{hybrid_classifier_forward.1} parent=11 // pred_fallthru
          _
      $region12: #{hybrid_classifier_forward.1} parent=5 // pred_fallthru
        _
      %p177 = scmp.lt.s32.totalorder %s14, 2
      // Predicated region
      $region29: #{hybrid_classifier_forward.1} parent=5 // pred_check
        %p178 = pneg %p177
      $region30: #{hybrid_classifier_forward.1} parent=5 // pred_check_branch
        %180 = sbr.rel (%p178) target = $region32
      $region31: #{hybrid_classifier_forward.1} parent=5 // pred_region
        // Predicated region
        $region33: #{hybrid_classifier_forward.1} parent=31 // pred_check
          %p181 = pneg %p34
        $region34: #{hybrid_classifier_forward.1} parent=31 // pred_check_branch
          %183 = sbr.rel (%p181) target = $region36
        $region35: #{hybrid_classifier_forward.1} parent=31 // pred_region
          %p184 = scmp.lt.s32.totalorder %s14, 1
          %s185 = scalar_select %p184, %s14, 1
          %s186 = smul.addr %s185, 3
          %s187 = smul.addr %s186, 4
          %s188 = scalar_lea.vmem %s0, %s187
        $region36: #{hybrid_classifier_forward.1} parent=31 // pred_fallthru
          _
      $region32: #{hybrid_classifier_forward.1} parent=5 // pred_fallthru
        _
      %p189 = scmp.le.s32.totalorder 1, %s14
      %p190 = scmp.lt.s32.totalorder %s14, 3
      %p191 = pnand %p189, %p190
      %p192 = pneg %p191
      // Predicated region
      $region37: #{hybrid_classifier_forward.1} parent=5 // pred_check
        _
      $region38: #{hybrid_classifier_forward.1} parent=5 // pred_check_branch
        %194 = sbr.rel (%p191) target = $region40
      $region39: #{hybrid_classifier_forward.1} parent=5 // pred_region
        %s195 = ssub.s32 %s14, 1
        %p196 = scmp.lt.s32.totalorder %s19, 1
        %s197 = scalar_select %p196, %s19, 1
        %s198 = smul.addr %s197, 3
        %s199 = smul.addr %s198, 4
        %s200 = scalar_lea.vmem %s0, %s199
        %p201 = pneg %p40
        %p202 = pneg %p37
        %p203 = pneg %p61
        %p204 = pneg %p58
        %p205 = pneg %p82
        %p206 = pneg %p79
        %p207 = pneg %p103
        %p208 = pneg %p100
        %p209 = pneg %p124
        %p210 = pneg %p121
        %p211 = pneg %p150
        %p212 = pneg %p147
        %s213 = sand.u32 %s137, 1
        %s214 = scalar_lea.sflag [#allocation3], %s213
        %s215 = sand.u32 %s137, 1
        %s216 = scalar_lea.vmem [#allocation2], %s215
        %p217 = scmp.lt.s32.totalorder %s19, 1
        %s218 = scalar_select %p217, %s19, 1
        %s219 = smul.addr %s218, 3
        %s220 = smul.addr %s219, 4
        %s221 = scalar_lea.vmem %s0, %s220
        %v222 = vlaneseq
        %v223 = vand.u32 %v222, 127
        %v224 = vadd.s32 %v223, 128
        %vm225 = vcmp.lt.s32.totalorder %v223, 0
        %v226 = vsub.s32 0, %v223
        %v227 = vsel %vm225, %v226, %v223
        %v228 = vshrl.u32 %v227, 4
        %v229 = vand.u32 %v227, 15
        %v230 = vsub.s32 0, %v229
        %v231 = vsel %vm225, %v230, %v229
        %vm232 = vcmp.lt.s32.totalorder %v224, 0
        %v233 = vsub.s32 0, %v224
        %v234 = vsel %vm232, %v233, %v224
        %v235 = vshrl.u32 %v234, 4
        %v236 = vand.u32 %v234, 15
        %v237 = vsub.s32 0, %v236
        %v238 = vsel %vm232, %v237, %v236
        %vm239 = vcmp.ne.s32.totalorder %v231, 0
        %vm240 = vcmp.ne.s32.totalorder %v238, 0
        %vm241 = vcmp.lt.s32.totalorder %v231, 0
        %vm242 = vcmp.lt.s32.totalorder %v238, 0
        %vm243 = vmand %vm241, %vm239
        %vm244 = vmand %vm242, %vm240
        %v245 = vadd.s32 %v231, 16
        %v246 = vadd.s32 %v238, 16
        %v247 = vsel %vm243, %v245, %v231
        %v248 = vsel %vm244, %v246, %v238
        %vm249 = vcmp.gt.s32.totalorder %v247, 0
        %vm250 = vcmp.gt.s32.totalorder %v248, 0
        %v251 = vsel %vm249, 1, 0
        %v252 = vsel %vm250, 1, 0
        %v253 = vcvt.s32.f32 %v251
        %v254 = vcvt.s32.f32 %v252
        %vm255 = vcmp.lt.s32.totalorder %v247, 15
        %vm256 = vcmp.lt.s32.totalorder %v248, 15
        %v257 = vsel %vm255, 1, 0
        %v258 = vsel %vm256, 1, 0
        %v259 = vcvt.s32.f32 %v257
        %v260 = vcvt.s32.f32 %v258
        %v261 = vld [vmem:[%s221] sm:$0xff]
        %v262 = vld [vmem:[%s1] sm:$0xff]
        %v263 = vld [vmem:[%s221 + $0x8] sm:$0xf]
        %s264 = scalar_lea.vmem %s1, 24
        %v265 = vld [vmem:[%s264] sm:$0xff]
        %v268 = vcombine.high %v261, %v261
        %269 = vrot.lane.b32.xlu0 %v261, 112
        %v270 = vpop.permute.xlu0 %269
        %271 = vrot.lane.b32.xlu0 %v268, 112
        %v272 = vpop.permute.xlu0 %271
        %273 = vrot.lane.b32.xlu0 %v263, 112
        %v274 = vpop.permute.xlu0 %273
        %vm275 = vcmask 916480
        %v276 = vsel %vm275, %v270, %v272
        %v277 = vsel %vm275, %v272, %v274
        %vm278 = vcmask 31744
        %v280 = vsel %vm278, %v265, 0
        %vm282 = vcmask 1043456
        %v283 = vsel %vm282, %v276, 0
        %v285 = vsel %vm282, %v277, 0
        %287 = vmatprep.subr.mxu0 0.0
        %288 = vmatpush1.msra.mxu0 0.0
        %289 = vmatprep.subr.mxu0 0.0
        %290 = vmatpush1.msra.mxu0 0.0
        %291 = vmatprep.subr.mxu0 0.0
        %292 = vmatpush1.msra.mxu0 0.0
        %293 = vmatprep.subr.mxu0 0.0
        %294 = vmatpush1.msra.mxu0 0.0
        %295 = vmatprep.subr.mxu0 0.0
        %296 = vmatpush1.msra.mxu0 0.0
        %297 = vmatprep.subr.mxu0 0.0
        %298 = vmatpush1.msra.mxu0 0.0
        %299 = vmatprep.subr.mxu0 0.0
        %300 = vmatpush1.msra.mxu0 0.0
        %301 = vmatprep.subr.mxu0 0.0
        %302 = vmatpush1.msra.mxu0 0.0
        %303 = vmatprep.subr.mxu0 0.0
        %304 = vmatpush1.msra.mxu0 0.0
        %305 = vmatprep.subr.mxu0 0.0
        %306 = vmatpush1.msra.mxu0 0.0
        %307 = vmatprep.subr.mxu0 0.0
        %308 = vmatpush1.msra.mxu0 0.0
        %309 = vmatprep.subr.mxu0 0.0
        %310 = vmatpush1.msra.mxu0 0.0
        %311 = vmatprep.subr.mxu0 0.0
        %312 = vmatpush1.msra.mxu0 0.0
        %313 = vmatprep.subr.mxu0 0.0
        %314 = vmatpush1.msra.mxu0 0.0
        %315 = vmatprep.subr.mxu0 0.0
        %316 = vmatpush1.msra.mxu0 0.0
        %317 = vmatprep.subr.mxu0 %v285
        %318 = vmatpush1.msra.mxu0 %v283
        %319 = vmatprep.subr.mxu0 0.0
        %320 = vmatpush2.msra.mxu0 0.0
        %321 = vmatprep.subr.mxu0 0.0
        %322 = vmatpush2.msra.mxu0 0.0
        %323 = vmatprep.subr.mxu0 0.0
        %324 = vmatpush2.msra.mxu0 0.0
        %325 = vmatprep.subr.mxu0 0.0
        %326 = vmatpush2.msra.mxu0 0.0
        %327 = vmatprep.subr.mxu0 0.0
        %328 = vmatpush2.msra.mxu0 0.0
        %329 = vmatprep.subr.mxu0 0.0
        %330 = vmatpush2.msra.mxu0 0.0
        %331 = vmatprep.subr.mxu0 0.0
        %332 = vmatpush2.msra.mxu0 0.0
        %333 = vmatprep.subr.mxu0 0.0
        %334 = vmatpush2.msra.mxu0 0.0
        %335 = vmatprep.subr.mxu0 0.0
        %336 = vmatpush2.msra.mxu0 0.0
        %337 = vmatprep.subr.mxu0 0.0
        %338 = vmatpush2.msra.mxu0 0.0
        %339 = vmatprep.subr.mxu0 0.0
        %340 = vmatpush2.msra.mxu0 0.0
        %341 = vmatprep.subr.mxu0 0.0
        %342 = vmatpush2.msra.mxu0 0.0
        %343 = vmatprep.subr.mxu0 0.0
        %344 = vmatpush2.msra.mxu0 0.0
        %345 = vmatprep.subr.mxu0 0.0
        %346 = vmatpush2.msra.mxu0 0.0
        %347 = vmatprep.subr.mxu0 0.0
        %348 = vmatpush2.msra.mxu0 0.0
        %349 = vmatprep.subr.mxu0 0.0
        %350 = vmatpush2.msra.mxu0 0.0
        %351 = vmatprep.mubr.f32.mxu0 0.0
        %352 = vmatmul.mubr.f32.gmra.mxu0 %v280
        %v353 = vpop.f32.mrf.mxu0
        %v354 = vadd.f32 0.0, %v353
        %v355 = vpop.f32.mrf.mxu0
        %v356 = vadd.f32 0.0, %v355
        %357 = vdwg.mxu0
        %v359 = vsel %vm278, %v262, 0
        %v361 = vsel %vm282, %v261, 0
        %v363 = vsel %vm282, %v268, 0
        %365 = vmatprep.subr.mxu0 0.0
        %366 = vmatpush1.msra.mxu0 0.0
        %367 = vmatprep.subr.mxu0 0.0
        %368 = vmatpush1.msra.mxu0 0.0
        %369 = vmatprep.subr.mxu0 0.0
        %370 = vmatpush1.msra.mxu0 0.0
        %371 = vmatprep.subr.mxu0 0.0
        %372 = vmatpush1.msra.mxu0 0.0
        %373 = vmatprep.subr.mxu0 0.0
        %374 = vmatpush1.msra.mxu0 0.0
        %375 = vmatprep.subr.mxu0 0.0
        %376 = vmatpush1.msra.mxu0 0.0
        %377 = vmatprep.subr.mxu0 0.0
        %378 = vmatpush1.msra.mxu0 0.0
        %379 = vmatprep.subr.mxu0 0.0
        %380 = vmatpush1.msra.mxu0 0.0
        %381 = vmatprep.subr.mxu0 0.0
        %382 = vmatpush1.msra.mxu0 0.0
        %383 = vmatprep.subr.mxu0 0.0
        %384 = vmatpush1.msra.mxu0 0.0
        %385 = vmatprep.subr.mxu0 0.0
        %386 = vmatpush1.msra.mxu0 0.0
        %387 = vmatprep.subr.mxu0 0.0
        %388 = vmatpush1.msra.mxu0 0.0
        %389 = vmatprep.subr.mxu0 0.0
        %390 = vmatpush1.msra.mxu0 0.0
        %391 = vmatprep.subr.mxu0 0.0
        %392 = vmatpush1.msra.mxu0 0.0
        %393 = vmatprep.subr.mxu0 0.0
        %394 = vmatpush1.msra.mxu0 0.0
        %395 = vmatprep.subr.mxu0 %v363
        %396 = vmatpush1.msra.mxu0 %v361
        %397 = vmatprep.subr.mxu0 0.0
        %398 = vmatpush2.msra.mxu0 0.0
        %399 = vmatprep.subr.mxu0 0.0
        %400 = vmatpush2.msra.mxu0 0.0
        %401 = vmatprep.subr.mxu0 0.0
        %402 = vmatpush2.msra.mxu0 0.0
        %403 = vmatprep.subr.mxu0 0.0
        %404 = vmatpush2.msra.mxu0 0.0
        %405 = vmatprep.subr.mxu0 0.0
        %406 = vmatpush2.msra.mxu0 0.0
        %407 = vmatprep.subr.mxu0 0.0
        %408 = vmatpush2.msra.mxu0 0.0
        %409 = vmatprep.subr.mxu0 0.0
        %410 = vmatpush2.msra.mxu0 0.0
        %411 = vmatprep.subr.mxu0 0.0
        %412 = vmatpush2.msra.mxu0 0.0
        %413 = vmatprep.subr.mxu0 0.0
        %414 = vmatpush2.msra.mxu0 0.0
        %415 = vmatprep.subr.mxu0 0.0
        %416 = vmatpush2.msra.mxu0 0.0
        %417 = vmatprep.subr.mxu0 0.0
        %418 = vmatpush2.msra.mxu0 0.0
        %419 = vmatprep.subr.mxu0 0.0
        %420 = vmatpush2.msra.mxu0 0.0
        %421 = vmatprep.subr.mxu0 0.0
        %422 = vmatpush2.msra.mxu0 0.0
        %423 = vmatprep.subr.mxu0 0.0
        %424 = vmatpush2.msra.mxu0 0.0
        %425 = vmatprep.subr.mxu0 0.0
        %426 = vmatpush2.msra.mxu0 0.0
        %427 = vmatprep.subr.mxu0 0.0
        %428 = vmatpush2.msra.mxu0 0.0
        %429 = vmatprep.mubr.f32.mxu0 0.0
        %430 = vmatmul.mubr.f32.gmra.mxu0 %v359
        %v431 = vpop.f32.mrf.mxu0
        %v432 = vadd.f32 %v354, %v431
        %v433 = vpop.f32.mrf.mxu0
        %v434 = vadd.f32 %v356, %v433
        %435 = vdwg.mxu0
        %v436 = vld [vmem:[%s221] sm:$0xff]
        %v437 = vld [vmem:[%s221 + $0x8] sm:$0xf]
        %s438 = scalar_lea.vmem %s1, 48
        %v439 = vld [vmem:[%s438] sm:$0xff]
        %v442 = vcombine.high %v436, %v436
        %443 = vrot.lane.b32.xlu0 %v436, 96
        %v444 = vpop.permute.xlu0 %443
        %445 = vrot.lane.b32.xlu0 %v442, 96
        %v446 = vpop.permute.xlu0 %445
        %447 = vrot.lane.b32.xlu0 %v437, 96
        %v448 = vpop.permute.xlu0 %447
        %vm449 = vcmask 785408
        %v450 = vsel %vm449, %v444, %v446
        %v451 = vsel %vm449, %v446, %v448
        %v453 = vsel %vm278, %v439, 0
        %v455 = vsel %vm282, %v450, 0
        %v457 = vsel %vm282, %v451, 0
        %459 = vmatprep.subr.mxu0 0.0
        %460 = vmatpush1.msra.mxu0 0.0
        %461 = vmatprep.subr.mxu0 0.0
        %462 = vmatpush1.msra.mxu0 0.0
        %463 = vmatprep.subr.mxu0 0.0
        %464 = vmatpush1.msra.mxu0 0.0
        %465 = vmatprep.subr.mxu0 0.0
        %466 = vmatpush1.msra.mxu0 0.0
        %467 = vmatprep.subr.mxu0 0.0
        %468 = vmatpush1.msra.mxu0 0.0
        %469 = vmatprep.subr.mxu0 0.0
        %470 = vmatpush1.msra.mxu0 0.0
        %471 = vmatprep.subr.mxu0 0.0
        %472 = vmatpush1.msra.mxu0 0.0
        %473 = vmatprep.subr.mxu0 0.0
        %474 = vmatpush1.msra.mxu0 0.0
        %475 = vmatprep.subr.mxu0 0.0
        %476 = vmatpush1.msra.mxu0 0.0
        %477 = vmatprep.subr.mxu0 0.0
        %478 = vmatpush1.msra.mxu0 0.0
        %479 = vmatprep.subr.mxu0 0.0
        %480 = vmatpush1.msra.mxu0 0.0
        %481 = vmatprep.subr.mxu0 0.0
        %482 = vmatpush1.msra.mxu0 0.0
        %483 = vmatprep.subr.mxu0 0.0
        %484 = vmatpush1.msra.mxu0 0.0
        %485 = vmatprep.subr.mxu0 0.0
        %486 = vmatpush1.msra.mxu0 0.0
        %487 = vmatprep.subr.mxu0 0.0
        %488 = vmatpush1.msra.mxu0 0.0
        %489 = vmatprep.subr.mxu0 %v457
        %490 = vmatpush1.msra.mxu0 %v455
        %491 = vmatprep.subr.mxu0 0.0
        %492 = vmatpush2.msra.mxu0 0.0
        %493 = vmatprep.subr.mxu0 0.0
        %494 = vmatpush2.msra.mxu0 0.0
        %495 = vmatprep.subr.mxu0 0.0
        %496 = vmatpush2.msra.mxu0 0.0
        %497 = vmatprep.subr.mxu0 0.0
        %498 = vmatpush2.msra.mxu0 0.0
        %499 = vmatprep.subr.mxu0 0.0
        %500 = vmatpush2.msra.mxu0 0.0
        %501 = vmatprep.subr.mxu0 0.0
        %502 = vmatpush2.msra.mxu0 0.0
        %503 = vmatprep.subr.mxu0 0.0
        %504 = vmatpush2.msra.mxu0 0.0
        %505 = vmatprep.subr.mxu0 0.0
        %506 = vmatpush2.msra.mxu0 0.0
        %507 = vmatprep.subr.mxu0 0.0
        %508 = vmatpush2.msra.mxu0 0.0
        %509 = vmatprep.subr.mxu0 0.0
        %510 = vmatpush2.msra.mxu0 0.0
        %511 = vmatprep.subr.mxu0 0.0
        %512 = vmatpush2.msra.mxu0 0.0
        %513 = vmatprep.subr.mxu0 0.0
        %514 = vmatpush2.msra.mxu0 0.0
        %515 = vmatprep.subr.mxu0 0.0
        %516 = vmatpush2.msra.mxu0 0.0
        %517 = vmatprep.subr.mxu0 0.0
        %518 = vmatpush2.msra.mxu0 0.0
        %519 = vmatprep.subr.mxu0 0.0
        %520 = vmatpush2.msra.mxu0 0.0
        %521 = vmatprep.subr.mxu0 0.0
        %522 = vmatpush2.msra.mxu0 0.0
        %523 = vmatprep.mubr.f32.mxu0 0.0
        %524 = vmatmul.mubr.f32.gmra.mxu0 %v453
        %v525 = vpop.f32.mrf.mxu0
        %v526 = vadd.f32 0.0, %v525
        %v527 = vpop.f32.mrf.mxu0
        %v528 = vadd.f32 0.0, %v527
        %529 = vdwg.mxu0
        %v530 = vadd.f32 %v432, %v526
        %v531 = vadd.f32 %v434, %v528
        %v532 = vmul.f32 %v530, %v253
        %v533 = vmul.f32 %v531, %v254
        %v534 = vadd.f32 %v532, 0.0
        %v535 = vadd.f32 %v533, 0.0
        %v536 = vld [vmem:[%s221] sm:$0xff]
        %v537 = vld [vmem:[%s221 + $0x8] sm:$0xf]
        %s538 = scalar_lea.vmem %s1, 8
        %v539 = vld [vmem:[%s538] sm:$0xff]
        %s540 = scalar_lea.vmem %s1, 32
        %v541 = vld [vmem:[%s540] sm:$0xff]
        %v544 = vcombine.high %v536, %v536
        %545 = vrot.lane.b32.xlu0 %v536, 111
        %v546 = vpop.permute.xlu0 %545
        %547 = vrot.lane.b32.xlu0 %v544, 111
        %v548 = vpop.permute.xlu0 %547
        %549 = vrot.lane.b32.xlu0 %v537, 111
        %v550 = vpop.permute.xlu0 %549
        %vm551 = vcmask 908288
        %v552 = vsel %vm551, %v546, %v548
        %v553 = vsel %vm551, %v548, %v550
        %v555 = vsel %vm278, %v541, 0
        %v557 = vsel %vm282, %v552, 0
        %v559 = vsel %vm282, %v553, 0
        %561 = vmatprep.subr.mxu0 0.0
        %562 = vmatpush1.msra.mxu0 0.0
        %563 = vmatprep.subr.mxu0 0.0
        %564 = vmatpush1.msra.mxu0 0.0
        %565 = vmatprep.subr.mxu0 0.0
        %566 = vmatpush1.msra.mxu0 0.0
        %567 = vmatprep.subr.mxu0 0.0
        %568 = vmatpush1.msra.mxu0 0.0
        %569 = vmatprep.subr.mxu0 0.0
        %570 = vmatpush1.msra.mxu0 0.0
        %571 = vmatprep.subr.mxu0 0.0
        %572 = vmatpush1.msra.mxu0 0.0
        %573 = vmatprep.subr.mxu0 0.0
        %574 = vmatpush1.msra.mxu0 0.0
        %575 = vmatprep.subr.mxu0 0.0
        %576 = vmatpush1.msra.mxu0 0.0
        %577 = vmatprep.subr.mxu0 0.0
        %578 = vmatpush1.msra.mxu0 0.0
        %579 = vmatprep.subr.mxu0 0.0
        %580 = vmatpush1.msra.mxu0 0.0
        %581 = vmatprep.subr.mxu0 0.0
        %582 = vmatpush1.msra.mxu0 0.0
        %583 = vmatprep.subr.mxu0 0.0
        %584 = vmatpush1.msra.mxu0 0.0
        %585 = vmatprep.subr.mxu0 0.0
        %586 = vmatpush1.msra.mxu0 0.0
        %587 = vmatprep.subr.mxu0 0.0
        %588 = vmatpush1.msra.mxu0 0.0
        %589 = vmatprep.subr.mxu0 0.0
        %590 = vmatpush1.msra.mxu0 0.0
        %591 = vmatprep.subr.mxu0 %v559
        %592 = vmatpush1.msra.mxu0 %v557
        %593 = vmatprep.subr.mxu0 0.0
        %594 = vmatpush2.msra.mxu0 0.0
        %595 = vmatprep.subr.mxu0 0.0
        %596 = vmatpush2.msra.mxu0 0.0
        %597 = vmatprep.subr.mxu0 0.0
        %598 = vmatpush2.msra.mxu0 0.0
        %599 = vmatprep.subr.mxu0 0.0
        %600 = vmatpush2.msra.mxu0 0.0
        %601 = vmatprep.subr.mxu0 0.0
        %602 = vmatpush2.msra.mxu0 0.0
        %603 = vmatprep.subr.mxu0 0.0
        %604 = vmatpush2.msra.mxu0 0.0
        %605 = vmatprep.subr.mxu0 0.0
        %606 = vmatpush2.msra.mxu0 0.0
        %607 = vmatprep.subr.mxu0 0.0
        %608 = vmatpush2.msra.mxu0 0.0
        %609 = vmatprep.subr.mxu0 0.0
        %610 = vmatpush2.msra.mxu0 0.0
        %611 = vmatprep.subr.mxu0 0.0
        %612 = vmatpush2.msra.mxu0 0.0
        %613 = vmatprep.subr.mxu0 0.0
        %614 = vmatpush2.msra.mxu0 0.0
        %615 = vmatprep.subr.mxu0 0.0
        %616 = vmatpush2.msra.mxu0 0.0
        %617 = vmatprep.subr.mxu0 0.0
        %618 = vmatpush2.msra.mxu0 0.0
        %619 = vmatprep.subr.mxu0 0.0
        %620 = vmatpush2.msra.mxu0 0.0
        %621 = vmatprep.subr.mxu0 0.0
        %622 = vmatpush2.msra.mxu0 0.0
        %623 = vmatprep.subr.mxu0 0.0
        %624 = vmatpush2.msra.mxu0 0.0
        %625 = vmatprep.mubr.f32.mxu0 0.0
        %626 = vmatmul.mubr.f32.gmra.mxu0 %v555
        %v627 = vpop.f32.mrf.mxu0
        %v628 = vadd.f32 0.0, %v627
        %v629 = vpop.f32.mrf.mxu0
        %v630 = vadd.f32 0.0, %v629
        %631 = vdwg.mxu0
        %632 = vrot.lane.b32.xlu0 %v536, 127
        %v633 = vpop.permute.xlu0 %632
        %634 = vrot.lane.b32.xlu0 %v544, 127
        %v635 = vpop.permute.xlu0 %634
        %636 = vrot.lane.b32.xlu0 %v537, 127
        %v637 = vpop.permute.xlu0 %636
        %vm638 = vcmask 1039360
        %v639 = vsel %vm638, %v633, %v635
        %v640 = vsel %vm638, %v635, %v637
        %v642 = vsel %vm278, %v539, 0
        %v644 = vsel %vm282, %v639, 0
        %v646 = vsel %vm282, %v640, 0
        %648 = vmatprep.subr.mxu0 0.0
        %649 = vmatpush1.msra.mxu0 0.0
        %650 = vmatprep.subr.mxu0 0.0
        %651 = vmatpush1.msra.mxu0 0.0
        %652 = vmatprep.subr.mxu0 0.0
        %653 = vmatpush1.msra.mxu0 0.0
        %654 = vmatprep.subr.mxu0 0.0
        %655 = vmatpush1.msra.mxu0 0.0
        %656 = vmatprep.subr.mxu0 0.0
        %657 = vmatpush1.msra.mxu0 0.0
        %658 = vmatprep.subr.mxu0 0.0
        %659 = vmatpush1.msra.mxu0 0.0
        %660 = vmatprep.subr.mxu0 0.0
        %661 = vmatpush1.msra.mxu0 0.0
        %662 = vmatprep.subr.mxu0 0.0
        %663 = vmatpush1.msra.mxu0 0.0
        %664 = vmatprep.subr.mxu0 0.0
        %665 = vmatpush1.msra.mxu0 0.0
        %666 = vmatprep.subr.mxu0 0.0
        %667 = vmatpush1.msra.mxu0 0.0
        %668 = vmatprep.subr.mxu0 0.0
        %669 = vmatpush1.msra.mxu0 0.0
        %670 = vmatprep.subr.mxu0 0.0
        %671 = vmatpush1.msra.mxu0 0.0
        %672 = vmatprep.subr.mxu0 0.0
        %673 = vmatpush1.msra.mxu0 0.0
        %674 = vmatprep.subr.mxu0 0.0
        %675 = vmatpush1.msra.mxu0 0.0
        %676 = vmatprep.subr.mxu0 0.0
        %677 = vmatpush1.msra.mxu0 0.0
        %678 = vmatprep.subr.mxu0 %v646
        %679 = vmatpush1.msra.mxu0 %v644
        %680 = vmatprep.subr.mxu0 0.0
        %681 = vmatpush2.msra.mxu0 0.0
        %682 = vmatprep.subr.mxu0 0.0
        %683 = vmatpush2.msra.mxu0 0.0
        %684 = vmatprep.subr.mxu0 0.0
        %685 = vmatpush2.msra.mxu0 0.0
        %686 = vmatprep.subr.mxu0 0.0
        %687 = vmatpush2.msra.mxu0 0.0
        %688 = vmatprep.subr.mxu0 0.0
        %689 = vmatpush2.msra.mxu0 0.0
        %690 = vmatprep.subr.mxu0 0.0
        %691 = vmatpush2.msra.mxu0 0.0
        %692 = vmatprep.subr.mxu0 0.0
        %693 = vmatpush2.msra.mxu0 0.0
        %694 = vmatprep.subr.mxu0 0.0
        %695 = vmatpush2.msra.mxu0 0.0
        %696 = vmatprep.subr.mxu0 0.0
        %697 = vmatpush2.msra.mxu0 0.0
        %698 = vmatprep.subr.mxu0 0.0
        %699 = vmatpush2.msra.mxu0 0.0
        %700 = vmatprep.subr.mxu0 0.0
        %701 = vmatpush2.msra.mxu0 0.0
        %702 = vmatprep.subr.mxu0 0.0
        %703 = vmatpush2.msra.mxu0 0.0
        %704 = vmatprep.subr.mxu0 0.0
        %705 = vmatpush2.msra.mxu0 0.0
        %706 = vmatprep.subr.mxu0 0.0
        %707 = vmatpush2.msra.mxu0 0.0
        %708 = vmatprep.subr.mxu0 0.0
        %709 = vmatpush2.msra.mxu0 0.0
        %710 = vmatprep.subr.mxu0 0.0
        %711 = vmatpush2.msra.mxu0 0.0
        %712 = vmatprep.mubr.f32.mxu0 0.0
        %713 = vmatmul.mubr.f32.gmra.mxu0 %v642
        %v714 = vpop.f32.mrf.mxu0
        %v715 = vadd.f32 %v628, %v714
        %v716 = vpop.f32.mrf.mxu0
        %v717 = vadd.f32 %v630, %v716
        %718 = vdwg.mxu0
        %v719 = vld [vmem:[%s221] sm:$0xff]
        %v720 = vld [vmem:[%s221 + $0x8] sm:$0xf]
        %s721 = scalar_lea.vmem %s1, 56
        %v722 = vld [vmem:[%s721] sm:$0xff]
        %v725 = vcombine.high %v719, %v719
        %726 = vrot.lane.b32.xlu0 %v719, 95
        %v727 = vpop.permute.xlu0 %726
        %728 = vrot.lane.b32.xlu0 %v725, 95
        %v729 = vpop.permute.xlu0 %728
        %730 = vrot.lane.b32.xlu0 %v720, 95
        %v731 = vpop.permute.xlu0 %730
        %vm732 = vcmask 777216
        %v733 = vsel %vm732, %v727, %v729
        %v734 = vsel %vm732, %v729, %v731
        %v736 = vsel %vm278, %v722, 0
        %v738 = vsel %vm282, %v733, 0
        %v740 = vsel %vm282, %v734, 0
        %742 = vmatprep.subr.mxu0 0.0
        %743 = vmatpush1.msra.mxu0 0.0
        %744 = vmatprep.subr.mxu0 0.0
        %745 = vmatpush1.msra.mxu0 0.0
        %746 = vmatprep.subr.mxu0 0.0
        %747 = vmatpush1.msra.mxu0 0.0
        %748 = vmatprep.subr.mxu0 0.0
        %749 = vmatpush1.msra.mxu0 0.0
        %750 = vmatprep.subr.mxu0 0.0
        %751 = vmatpush1.msra.mxu0 0.0
        %752 = vmatprep.subr.mxu0 0.0
        %753 = vmatpush1.msra.mxu0 0.0
        %754 = vmatprep.subr.mxu0 0.0
        %755 = vmatpush1.msra.mxu0 0.0
        %756 = vmatprep.subr.mxu0 0.0
        %757 = vmatpush1.msra.mxu0 0.0
        %758 = vmatprep.subr.mxu0 0.0
        %759 = vmatpush1.msra.mxu0 0.0
        %760 = vmatprep.subr.mxu0 0.0
        %761 = vmatpush1.msra.mxu0 0.0
        %762 = vmatprep.subr.mxu0 0.0
        %763 = vmatpush1.msra.mxu0 0.0
        %764 = vmatprep.subr.mxu0 0.0
        %765 = vmatpush1.msra.mxu0 0.0
        %766 = vmatprep.subr.mxu0 0.0
        %767 = vmatpush1.msra.mxu0 0.0
        %768 = vmatprep.subr.mxu0 0.0
        %769 = vmatpush1.msra.mxu0 0.0
        %770 = vmatprep.subr.mxu0 0.0
        %771 = vmatpush1.msra.mxu0 0.0
        %772 = vmatprep.subr.mxu0 %v740
        %773 = vmatpush1.msra.mxu0 %v738
        %774 = vmatprep.subr.mxu0 0.0
        %775 = vmatpush2.msra.mxu0 0.0
        %776 = vmatprep.subr.mxu0 0.0
        %777 = vmatpush2.msra.mxu0 0.0
        %778 = vmatprep.subr.mxu0 0.0
        %779 = vmatpush2.msra.mxu0 0.0
        %780 = vmatprep.subr.mxu0 0.0
        %781 = vmatpush2.msra.mxu0 0.0
        %782 = vmatprep.subr.mxu0 0.0
        %783 = vmatpush2.msra.mxu0 0.0
        %784 = vmatprep.subr.mxu0 0.0
        %785 = vmatpush2.msra.mxu0 0.0
        %786 = vmatprep.subr.mxu0 0.0
        %787 = vmatpush2.msra.mxu0 0.0
        %788 = vmatprep.subr.mxu0 0.0
        %789 = vmatpush2.msra.mxu0 0.0
        %790 = vmatprep.subr.mxu0 0.0
        %791 = vmatpush2.msra.mxu0 0.0
        %792 = vmatprep.subr.mxu0 0.0
        %793 = vmatpush2.msra.mxu0 0.0
        %794 = vmatprep.subr.mxu0 0.0
        %795 = vmatpush2.msra.mxu0 0.0
        %796 = vmatprep.subr.mxu0 0.0
        %797 = vmatpush2.msra.mxu0 0.0
        %798 = vmatprep.subr.mxu0 0.0
        %799 = vmatpush2.msra.mxu0 0.0
        %800 = vmatprep.subr.mxu0 0.0
        %801 = vmatpush2.msra.mxu0 0.0
        %802 = vmatprep.subr.mxu0 0.0
        %803 = vmatpush2.msra.mxu0 0.0
        %804 = vmatprep.subr.mxu0 0.0
        %805 = vmatpush2.msra.mxu0 0.0
        %806 = vmatprep.mubr.f32.mxu0 0.0
        %807 = vmatmul.mubr.f32.gmra.mxu0 %v736
        %v808 = vpop.f32.mrf.mxu0
        %v809 = vadd.f32 0.0, %v808
        %v810 = vpop.f32.mrf.mxu0
        %v811 = vadd.f32 0.0, %v810
        %812 = vdwg.mxu0
        %v813 = vadd.f32 %v715, %v809
        %v814 = vadd.f32 %v717, %v811
        %v815 = vadd.f32 %v534, %v813
        %v816 = vadd.f32 %v535, %v814
        %v817 = vld [vmem:[%s221] sm:$0xff]
        %v818 = vld [vmem:[%s221 + $0x8] sm:$0xf]
        %s819 = scalar_lea.vmem %s1, 16
        %v820 = vld [vmem:[%s819] sm:$0xff]
        %s821 = scalar_lea.vmem %s1, 40
        %v822 = vld [vmem:[%s821] sm:$0xff]
        %v825 = vcombine.high %v817, %v817
        %826 = vrot.lane.b32.xlu0 %v817, 110
        %v827 = vpop.permute.xlu0 %826
        %828 = vrot.lane.b32.xlu0 %v825, 110
        %v829 = vpop.permute.xlu0 %828
        %830 = vrot.lane.b32.xlu0 %v818, 110
        %v831 = vpop.permute.xlu0 %830
        %vm832 = vcmask 900096
        %v833 = vsel %vm832, %v827, %v829
        %v834 = vsel %vm832, %v829, %v831
        %v836 = vsel %vm278, %v822, 0
        %v838 = vsel %vm282, %v833, 0
        %v840 = vsel %vm282, %v834, 0
        %842 = vmatprep.subr.mxu0 0.0
        %843 = vmatpush1.msra.mxu0 0.0
        %844 = vmatprep.subr.mxu0 0.0
        %845 = vmatpush1.msra.mxu0 0.0
        %846 = vmatprep.subr.mxu0 0.0
        %847 = vmatpush1.msra.mxu0 0.0
        %848 = vmatprep.subr.mxu0 0.0
        %849 = vmatpush1.msra.mxu0 0.0
        %850 = vmatprep.subr.mxu0 0.0
        %851 = vmatpush1.msra.mxu0 0.0
        %852 = vmatprep.subr.mxu0 0.0
        %853 = vmatpush1.msra.mxu0 0.0
        %854 = vmatprep.subr.mxu0 0.0
        %855 = vmatpush1.msra.mxu0 0.0
        %856 = vmatprep.subr.mxu0 0.0
        %857 = vmatpush1.msra.mxu0 0.0
        %858 = vmatprep.subr.mxu0 0.0
        %859 = vmatpush1.msra.mxu0 0.0
        %860 = vmatprep.subr.mxu0 0.0
        %861 = vmatpush1.msra.mxu0 0.0
        %862 = vmatprep.subr.mxu0 0.0
        %863 = vmatpush1.msra.mxu0 0.0
        %864 = vmatprep.subr.mxu0 0.0
        %865 = vmatpush1.msra.mxu0 0.0
        %866 = vmatprep.subr.mxu0 0.0
        %867 = vmatpush1.msra.mxu0 0.0
        %868 = vmatprep.subr.mxu0 0.0
        %869 = vmatpush1.msra.mxu0 0.0
        %870 = vmatprep.subr.mxu0 0.0
        %871 = vmatpush1.msra.mxu0 0.0
        %872 = vmatprep.subr.mxu0 %v840
        %873 = vmatpush1.msra.mxu0 %v838
        %874 = vmatprep.subr.mxu0 0.0
        %875 = vmatpush2.msra.mxu0 0.0
        %876 = vmatprep.subr.mxu0 0.0
        %877 = vmatpush2.msra.mxu0 0.0
        %878 = vmatprep.subr.mxu0 0.0
        %879 = vmatpush2.msra.mxu0 0.0
        %880 = vmatprep.subr.mxu0 0.0
        %881 = vmatpush2.msra.mxu0 0.0
        %882 = vmatprep.subr.mxu0 0.0
        %883 = vmatpush2.msra.mxu0 0.0
        %884 = vmatprep.subr.mxu0 0.0
        %885 = vmatpush2.msra.mxu0 0.0
        %886 = vmatprep.subr.mxu0 0.0
        %887 = vmatpush2.msra.mxu0 0.0
        %888 = vmatprep.subr.mxu0 0.0
        %889 = vmatpush2.msra.mxu0 0.0
        %890 = vmatprep.subr.mxu0 0.0
        %891 = vmatpush2.msra.mxu0 0.0
        %892 = vmatprep.subr.mxu0 0.0
        %893 = vmatpush2.msra.mxu0 0.0
        %894 = vmatprep.subr.mxu0 0.0
        %895 = vmatpush2.msra.mxu0 0.0
        %896 = vmatprep.subr.mxu0 0.0
        %897 = vmatpush2.msra.mxu0 0.0
        %898 = vmatprep.subr.mxu0 0.0
        %899 = vmatpush2.msra.mxu0 0.0
        %900 = vmatprep.subr.mxu0 0.0
        %901 = vmatpush2.msra.mxu0 0.0
        %902 = vmatprep.subr.mxu0 0.0
        %903 = vmatpush2.msra.mxu0 0.0
        %904 = vmatprep.subr.mxu0 0.0
        %905 = vmatpush2.msra.mxu0 0.0
        %906 = vmatprep.mubr.f32.mxu0 0.0
        %907 = vmatmul.mubr.f32.gmra.mxu0 %v836
        %v908 = vpop.f32.mrf.mxu0
        %v909 = vadd.f32 0.0, %v908
        %v910 = vpop.f32.mrf.mxu0
        %v911 = vadd.f32 0.0, %v910
        %912 = vdwg.mxu0
        %913 = vrot.lane.b32.xlu0 %v817, 126
        %v914 = vpop.permute.xlu0 %913
        %915 = vrot.lane.b32.xlu0 %v825, 126
        %v916 = vpop.permute.xlu0 %915
        %917 = vrot.lane.b32.xlu0 %v818, 126
        %v918 = vpop.permute.xlu0 %917
        %vm919 = vcmask 1031168
        %v920 = vsel %vm919, %v914, %v916
        %v921 = vsel %vm919, %v916, %v918
        %v923 = vsel %vm278, %v820, 0
        %v925 = vsel %vm282, %v920, 0
        %v927 = vsel %vm282, %v921, 0
        %929 = vmatprep.subr.mxu0 0.0
        %930 = vmatpush1.msra.mxu0 0.0
        %931 = vmatprep.subr.mxu0 0.0
        %932 = vmatpush1.msra.mxu0 0.0
        %933 = vmatprep.subr.mxu0 0.0
        %934 = vmatpush1.msra.mxu0 0.0
        %935 = vmatprep.subr.mxu0 0.0
        %936 = vmatpush1.msra.mxu0 0.0
        %937 = vmatprep.subr.mxu0 0.0
        %938 = vmatpush1.msra.mxu0 0.0
        %939 = vmatprep.subr.mxu0 0.0
        %940 = vmatpush1.msra.mxu0 0.0
        %941 = vmatprep.subr.mxu0 0.0
        %942 = vmatpush1.msra.mxu0 0.0
        %943 = vmatprep.subr.mxu0 0.0
        %944 = vmatpush1.msra.mxu0 0.0
        %945 = vmatprep.subr.mxu0 0.0
        %946 = vmatpush1.msra.mxu0 0.0
        %947 = vmatprep.subr.mxu0 0.0
        %948 = vmatpush1.msra.mxu0 0.0
        %949 = vmatprep.subr.mxu0 0.0
        %950 = vmatpush1.msra.mxu0 0.0
        %951 = vmatprep.subr.mxu0 0.0
        %952 = vmatpush1.msra.mxu0 0.0
        %953 = vmatprep.subr.mxu0 0.0
        %954 = vmatpush1.msra.mxu0 0.0
        %955 = vmatprep.subr.mxu0 0.0
        %956 = vmatpush1.msra.mxu0 0.0
        %957 = vmatprep.subr.mxu0 0.0
        %958 = vmatpush1.msra.mxu0 0.0
        %959 = vmatprep.subr.mxu0 %v927
        %960 = vmatpush1.msra.mxu0 %v925
        %961 = vmatprep.subr.mxu0 0.0
        %962 = vmatpush2.msra.mxu0 0.0
        %963 = vmatprep.subr.mxu0 0.0
        %964 = vmatpush2.msra.mxu0 0.0
        %965 = vmatprep.subr.mxu0 0.0
        %966 = vmatpush2.msra.mxu0 0.0
        %967 = vmatprep.subr.mxu0 0.0
        %968 = vmatpush2.msra.mxu0 0.0
        %969 = vmatprep.subr.mxu0 0.0
        %970 = vmatpush2.msra.mxu0 0.0
        %971 = vmatprep.subr.mxu0 0.0
        %972 = vmatpush2.msra.mxu0 0.0
        %973 = vmatprep.subr.mxu0 0.0
        %974 = vmatpush2.msra.mxu0 0.0
        %975 = vmatprep.subr.mxu0 0.0
        %976 = vmatpush2.msra.mxu0 0.0
        %977 = vmatprep.subr.mxu0 0.0
        %978 = vmatpush2.msra.mxu0 0.0
        %979 = vmatprep.subr.mxu0 0.0
        %980 = vmatpush2.msra.mxu0 0.0
        %981 = vmatprep.subr.mxu0 0.0
        %982 = vmatpush2.msra.mxu0 0.0
        %983 = vmatprep.subr.mxu0 0.0
        %984 = vmatpush2.msra.mxu0 0.0
        %985 = vmatprep.subr.mxu0 0.0
        %986 = vmatpush2.msra.mxu0 0.0
        %987 = vmatprep.subr.mxu0 0.0
        %988 = vmatpush2.msra.mxu0 0.0
        %989 = vmatprep.subr.mxu0 0.0
        %990 = vmatpush2.msra.mxu0 0.0
        %991 = vmatprep.subr.mxu0 0.0
        %992 = vmatpush2.msra.mxu0 0.0
        %993 = vmatprep.mubr.f32.mxu0 0.0
        %994 = vmatmul.mubr.f32.gmra.mxu0 %v923
        %v995 = vpop.f32.mrf.mxu0
        %v996 = vadd.f32 %v909, %v995
        %v997 = vpop.f32.mrf.mxu0
        %v998 = vadd.f32 %v911, %v997
        %999 = vdwg.mxu0
        %v1000 = vld [vmem:[%s221] sm:$0xff]
        %v1001 = vld [vmem:[%s221 + $0x8] sm:$0xf]
        %s1002 = scalar_lea.vmem %s1, 64
        %v1003 = vld [vmem:[%s1002] sm:$0xff]
        %v1006 = vcombine.high %v1000, %v1000
        %1007 = vrot.lane.b32.xlu0 %v1000, 94
        %v1008 = vpop.permute.xlu0 %1007
        %1009 = vrot.lane.b32.xlu0 %v1006, 94
        %v1010 = vpop.permute.xlu0 %1009
        %1011 = vrot.lane.b32.xlu0 %v1001, 94
        %v1012 = vpop.permute.xlu0 %1011
        %vm1013 = vcmask 769024
        %v1014 = vsel %vm1013, %v1008, %v1010
        %v1015 = vsel %vm1013, %v1010, %v1012
        %v1017 = vsel %vm278, %v1003, 0
        %v1019 = vsel %vm282, %v1014, 0
        %v1021 = vsel %vm282, %v1015, 0
        %1023 = vmatprep.subr.mxu0 0.0
        %1024 = vmatpush1.msra.mxu0 0.0
        %1025 = vmatprep.subr.mxu0 0.0
        %1026 = vmatpush1.msra.mxu0 0.0
        %1027 = vmatprep.subr.mxu0 0.0
        %1028 = vmatpush1.msra.mxu0 0.0
        %1029 = vmatprep.subr.mxu0 0.0
        %1030 = vmatpush1.msra.mxu0 0.0
        %1031 = vmatprep.subr.mxu0 0.0
        %1032 = vmatpush1.msra.mxu0 0.0
        %1033 = vmatprep.subr.mxu0 0.0
        %1034 = vmatpush1.msra.mxu0 0.0
        %1035 = vmatprep.subr.mxu0 0.0
        %1036 = vmatpush1.msra.mxu0 0.0
        %1037 = vmatprep.subr.mxu0 0.0
        %1038 = vmatpush1.msra.mxu0 0.0
        %1039 = vmatprep.subr.mxu0 0.0
        %1040 = vmatpush1.msra.mxu0 0.0
        %1041 = vmatprep.subr.mxu0 0.0
        %1042 = vmatpush1.msra.mxu0 0.0
        %1043 = vmatprep.subr.mxu0 0.0
        %1044 = vmatpush1.msra.mxu0 0.0
        %1045 = vmatprep.subr.mxu0 0.0
        %1046 = vmatpush1.msra.mxu0 0.0
        %1047 = vmatprep.subr.mxu0 0.0
        %1048 = vmatpush1.msra.mxu0 0.0
        %1049 = vmatprep.subr.mxu0 0.0
        %1050 = vmatpush1.msra.mxu0 0.0
        %1051 = vmatprep.subr.mxu0 0.0
        %1052 = vmatpush1.msra.mxu0 0.0
        %1053 = vmatprep.subr.mxu0 %v1021
        %1054 = vmatpush1.msra.mxu0 %v1019
        %1055 = vmatprep.subr.mxu0 0.0
        %1056 = vmatpush2.msra.mxu0 0.0
        %1057 = vmatprep.subr.mxu0 0.0
        %1058 = vmatpush2.msra.mxu0 0.0
        %1059 = vmatprep.subr.mxu0 0.0
        %1060 = vmatpush2.msra.mxu0 0.0
        %1061 = vmatprep.subr.mxu0 0.0
        %1062 = vmatpush2.msra.mxu0 0.0
        %1063 = vmatprep.subr.mxu0 0.0
        %1064 = vmatpush2.msra.mxu0 0.0
        %1065 = vmatprep.subr.mxu0 0.0
        %1066 = vmatpush2.msra.mxu0 0.0
        %1067 = vmatprep.subr.mxu0 0.0
        %1068 = vmatpush2.msra.mxu0 0.0
        %1069 = vmatprep.subr.mxu0 0.0
        %1070 = vmatpush2.msra.mxu0 0.0
        %1071 = vmatprep.subr.mxu0 0.0
        %1072 = vmatpush2.msra.mxu0 0.0
        %1073 = vmatprep.subr.mxu0 0.0
        %1074 = vmatpush2.msra.mxu0 0.0
        %1075 = vmatprep.subr.mxu0 0.0
        %1076 = vmatpush2.msra.mxu0 0.0
        %1077 = vmatprep.subr.mxu0 0.0
        %1078 = vmatpush2.msra.mxu0 0.0
        %1079 = vmatprep.subr.mxu0 0.0
        %1080 = vmatpush2.msra.mxu0 0.0
        %1081 = vmatprep.subr.mxu0 0.0
        %1082 = vmatpush2.msra.mxu0 0.0
        %1083 = vmatprep.subr.mxu0 0.0
        %1084 = vmatpush2.msra.mxu0 0.0
        %1085 = vmatprep.subr.mxu0 0.0
        %1086 = vmatpush2.msra.mxu0 0.0
        %1087 = vmatprep.mubr.f32.mxu0 0.0
        %1088 = vmatmul.mubr.f32.gmra.mxu0 %v1017
        %v1089 = vpop.f32.mrf.mxu0
        %v1090 = vadd.f32 0.0, %v1089
        %v1091 = vpop.f32.mrf.mxu0
        %v1092 = vadd.f32 0.0, %v1091
        %1093 = vdwg.mxu0
        %v1094 = vadd.f32 %v996, %v1090
        %v1095 = vadd.f32 %v998, %v1092
        %v1096 = vmul.f32 %v1094, %v259
        %v1097 = vmul.f32 %v1095, %v260
        %v1098 = vadd.f32 %v815, %v1096
        %v1099 = vadd.f32 %v816, %v1097
        %v1100 = vld [vmem:[%s2] sm:$0xff]
        %1102 = vset.pattern.permute.xlu0 0
        %1103 = vperm.xlu0 %1102, %v1100
        %v1104 = vpop.permute.xlu0 %1103
        %v1106 = vadd.f32 %v1098, %v1104
        %v1107 = vadd.f32 %v1099, %v1104
        %v1108 = vmax.f32 %v1106, 0.0
        %v1109 = vmax.f32 %v1107, 0.0
        %1110 = vmatprep.subr.mxu0 0.0
        %1111 = vmatpush1.xpose.msra.mxu0 0.0
        %1112 = vmatprep.subr.mxu0 0.0
        %1113 = vmatpush1.xpose.msra.mxu0 0.0
        %1114 = vmatprep.subr.mxu0 0.0
        %1115 = vmatpush1.xpose.msra.mxu0 0.0
        %1116 = vmatprep.subr.mxu0 0.0
        %1117 = vmatpush1.xpose.msra.mxu0 0.0
        %1118 = vmatprep.subr.mxu0 0.0
        %1119 = vmatpush1.xpose.msra.mxu0 0.0
        %1120 = vmatprep.subr.mxu0 0.0
        %1121 = vmatpush1.xpose.msra.mxu0 0.0
        %1122 = vmatprep.subr.mxu0 0.0
        %1123 = vmatpush1.xpose.msra.mxu0 0.0
        %1124 = vmatprep.subr.mxu0 0.0
        %1125 = vmatpush1.xpose.msra.mxu0 0.0
        %1126 = vmatprep.subr.mxu0 0.0
        %1127 = vmatpush1.xpose.msra.mxu0 0.0
        %1128 = vmatprep.subr.mxu0 0.0
        %1129 = vmatpush1.xpose.msra.mxu0 0.0
        %1130 = vmatprep.subr.mxu0 0.0
        %1131 = vmatpush1.xpose.msra.mxu0 0.0
        %1132 = vmatprep.subr.mxu0 0.0
        %1133 = vmatpush1.xpose.msra.mxu0 0.0
        %1134 = vmatprep.subr.mxu0 0.0
        %1135 = vmatpush1.xpose.msra.mxu0 0.0
        %1136 = vmatprep.subr.mxu0 0.0
        %1137 = vmatpush1.xpose.msra.mxu0 0.0
        %1138 = vmatprep.subr.mxu0 0.0
        %1139 = vmatpush1.xpose.msra.mxu0 0.0
        %1140 = vmatprep.subr.mxu0 %v1109
        %1141 = vmatpush1.xpose.msra.mxu0 %v1108
        %1142 = vmatprep.subr.mxu0 0.0
        %1143 = vmatpush2.xpose.msra.mxu0 0.0
        %1144 = vmatprep.subr.mxu0 0.0
        %1145 = vmatpush2.xpose.msra.mxu0 0.0
        %1146 = vmatprep.subr.mxu0 0.0
        %1147 = vmatpush2.xpose.msra.mxu0 0.0
        %1148 = vmatprep.subr.mxu0 0.0
        %1149 = vmatpush2.xpose.msra.mxu0 0.0
        %1150 = vmatprep.subr.mxu0 0.0
        %1151 = vmatpush2.xpose.msra.mxu0 0.0
        %1152 = vmatprep.subr.mxu0 0.0
        %1153 = vmatpush2.xpose.msra.mxu0 0.0
        %1154 = vmatprep.subr.mxu0 0.0
        %1155 = vmatpush2.xpose.msra.mxu0 0.0
        %1156 = vmatprep.subr.mxu0 0.0
        %1157 = vmatpush2.xpose.msra.mxu0 0.0
        %1158 = vmatprep.subr.mxu0 0.0
        %1159 = vmatpush2.xpose.msra.mxu0 0.0
        %1160 = vmatprep.subr.mxu0 0.0
        %1161 = vmatpush2.xpose.msra.mxu0 0.0
        %1162 = vmatprep.subr.mxu0 0.0
        %1163 = vmatpush2.xpose.msra.mxu0 0.0
        %1164 = vmatprep.subr.mxu0 0.0
        %1165 = vmatpush2.xpose.msra.mxu0 0.0
        %1166 = vmatprep.subr.mxu0 0.0
        %1167 = vmatpush2.xpose.msra.mxu0 0.0
        %1168 = vmatprep.subr.mxu0 0.0
        %1169 = vmatpush2.xpose.msra.mxu0 0.0
        %1170 = vmatprep.subr.mxu0 0.0
        %1171 = vmatpush2.xpose.msra.mxu0 0.0
        %1172 = vmatprep.subr.mxu0 0.0
        %1173 = vmatpush2.xpose.msra.mxu0 0.0
        %1174 = vmatprep.mubr.f32.mxu0 0.00390625
        %1175 = vmatmul.mubr.f32.gmra.mxu0 0.00390625
        %v1176 = vpop.f32.mrf.mxu0
        %v1177 = vadd.f32 0.0, %v1176
        %v1178 = vpop.f32.mrf.mxu0
        %1179 = vdwg.mxu0
        %v1180 = vld [vmem:[%s3] sm:$0xff]
        %v1181 = vld [vmem:[%s4] sm:$0x1]
        %vm1182 = vcmask 64512
        %v1184 = vsel %vm1182, %v1177, 0
        %1186 = vmatprep.subr.mxu0 0.0
        %1187 = vmatpush1.msra.mxu0 0.0
        %1188 = vmatprep.subr.mxu0 0.0
        %1189 = vmatpush1.msra.mxu0 0.0
        %1190 = vmatprep.subr.mxu0 0.0
        %1191 = vmatpush1.msra.mxu0 0.0
        %1192 = vmatprep.subr.mxu0 0.0
        %1193 = vmatpush1.msra.mxu0 0.0
        %1194 = vmatprep.subr.mxu0 0.0
        %1195 = vmatpush1.msra.mxu0 0.0
        %1196 = vmatprep.subr.mxu0 0.0
        %1197 = vmatpush1.msra.mxu0 0.0
        %1198 = vmatprep.subr.mxu0 0.0
        %1199 = vmatpush1.msra.mxu0 0.0
        %1200 = vmatprep.subr.mxu0 0.0
        %1201 = vmatpush1.msra.mxu0 0.0
        %1202 = vmatprep.subr.mxu0 0.0
        %1203 = vmatpush1.msra.mxu0 0.0
        %1204 = vmatprep.subr.mxu0 0.0
        %1205 = vmatpush1.msra.mxu0 0.0
        %1206 = vmatprep.subr.mxu0 0.0
        %1207 = vmatpush1.msra.mxu0 0.0
        %1208 = vmatprep.subr.mxu0 0.0
        %1209 = vmatpush1.msra.mxu0 0.0
        %1210 = vmatprep.subr.mxu0 0.0
        %1211 = vmatpush1.msra.mxu0 0.0
        %1212 = vmatprep.subr.mxu0 0.0
        %1213 = vmatpush1.msra.mxu0 0.0
        %1214 = vmatprep.subr.mxu0 0.0
        %1215 = vmatpush1.msra.mxu0 0.0
        %1216 = vmatprep.subr.mxu0 0.0
        %1217 = vmatpush1.msra.mxu0 %v1180
        %1218 = vmatprep.subr.mxu0 0.0
        %1219 = vmatpush2.msra.mxu0 0.0
        %1220 = vmatprep.subr.mxu0 0.0
        %1221 = vmatpush2.msra.mxu0 0.0
        %1222 = vmatprep.subr.mxu0 0.0
        %1223 = vmatpush2.msra.mxu0 0.0
        %1224 = vmatprep.subr.mxu0 0.0
        %1225 = vmatpush2.msra.mxu0 0.0
        %1226 = vmatprep.subr.mxu0 0.0
        %1227 = vmatpush2.msra.mxu0 0.0
        %1228 = vmatprep.subr.mxu0 0.0
        %1229 = vmatpush2.msra.mxu0 0.0
        %1230 = vmatprep.subr.mxu0 0.0
        %1231 = vmatpush2.msra.mxu0 0.0
        %1232 = vmatprep.subr.mxu0 0.0
        %1233 = vmatpush2.msra.mxu0 0.0
        %1234 = vmatprep.subr.mxu0 0.0
        %1235 = vmatpush2.msra.mxu0 0.0
        %1236 = vmatprep.subr.mxu0 0.0
        %1237 = vmatpush2.msra.mxu0 0.0
        %1238 = vmatprep.subr.mxu0 0.0
        %1239 = vmatpush2.msra.mxu0 0.0
        %1240 = vmatprep.subr.mxu0 0.0
        %1241 = vmatpush2.msra.mxu0 0.0
        %1242 = vmatprep.subr.mxu0 0.0
        %1243 = vmatpush2.msra.mxu0 0.0
        %1244 = vmatprep.subr.mxu0 0.0
        %1245 = vmatpush2.msra.mxu0 0.0
        %1246 = vmatprep.subr.mxu0 0.0
        %1247 = vmatpush2.msra.mxu0 0.0
        %1248 = vmatprep.subr.mxu0 0.0
        %1249 = vmatpush2.msra.mxu0 0.0
        %1250 = vmatprep.mubr.f32.mxu0 0.0
        %1251 = vmatmul.mubr.f32.gmra.mxu0 %v1184
        %v1252 = vpop.f32.mrf.mxu0
        %v1253 = vadd.f32 %v1181, %v1252
        %v1254 = vpop.f32.mrf.mxu0
        %1255 = vdwg.mxu0
        %1256 = vst [vmem:[%s216] sm:$0x1] %v1253
        %s1257 = sand.u32 %s137, 1
        %s1258 = scalar_lea.sflag [#allocation3], %s1257
        %s1259 = sand.u32 %s137, 1
        %s1260 = scalar_lea.vmem [#allocation2], %s1259
        // Predicated region
        $region41: #{hybrid_classifier_forward.1} parent=39 // pred_check
          %p1261 = pneg %p147
        $region42: #{hybrid_classifier_forward.1} parent=39 // pred_check_branch
          %1263 = sbr.rel (%p1261) target = $region44
        $region43: #{hybrid_classifier_forward.1} parent=39 // pred_region
          %s1265 = ssub.s32 16, 16
          %1266 = vsyncadd %s1258, %s1265
          %s1267 = smul.addr %s19, 16
          %s1268 = scalar_lea.hbm %s5, %s1267
          %s1270 = sshll.u32 %s1260, 4
          %s1271 = int_to_ptr.vmem [resolvable:$true] %s1270
          %1273 = dma.vmem_to_hbm [thread:$0]  %s1271, 16, %s1268, %s1258
        $region44: #{hybrid_classifier_forward.1} parent=39 // pred_fallthru
          _
      $region40: #{hybrid_classifier_forward.1} parent=5 // pred_fallthru
        _
      %p1274 = scmp.le.s32.totalorder 2, %s14
      // Predicated region
      $region45: #{hybrid_classifier_forward.1} parent=5 // pred_check
        %p1275 = pneg %p1274
      $region46: #{hybrid_classifier_forward.1} parent=5 // pred_check_branch
        %1277 = sbr.rel (%p1275) target = $region48
      $region47: #{hybrid_classifier_forward.1} parent=5 // pred_region
        %s1278 = ssub.s32 %s14, 2
        // Predicated region
        $region49: #{hybrid_classifier_forward.1} parent=47 // pred_check
          %p1279 = pneg %p153
        $region50: #{hybrid_classifier_forward.1} parent=47 // pred_check_branch
          %1281 = sbr.rel (%p1279) target = $region52
        $region51: #{hybrid_classifier_forward.1} parent=47 // pred_region
          %s1282 = sand.u32 %s138, 1
          %s1283 = scalar_lea.sflag [#allocation3], %s1282
          %s1284 = sand.u32 %s138, 1
          %s1285 = scalar_lea.vmem [#allocation2], %s1284
          %1286 = dma.done %s1283, 16
        $region52: #{hybrid_classifier_forward.1} parent=47 // pred_fallthru
          _
      $region48: #{hybrid_classifier_forward.1} parent=5 // pred_fallthru
        _
    $region6: #{hybrid_classifier_forward.1} parent=1 // loop_footer
      %s18 = sadd.s32 1, %s14
    $region7: #{hybrid_classifier_forward.1} parent=1 // loop_footer_branch
      %13 = sbr.rel target = $region3
    $region8: #{hybrid_classifier_forward.1} parent=1 // loop_exit
      _
    %1287 = vsyncpa [#allocation3], 1
    %s1288 = scalar_lea.sflag [#allocation3], 1
    %1289 = vsyncpa %s1288, 1

</llo_original>
